<compile_context>
chip_gen: v6e
topology: v6e:2x2x1
jax: 0.10.0
libtpu: 0.0.40
codegen_flags: <defaults>
</compile_context>

<pallas_src>
import math
from typing import Dict, List

import jax
import jax.numpy as jnp
from jax.experimental import pallas as pl
from jax.experimental.pallas import tpu as pltpu

TM_MAX = 2048          # max batch-tile rows (VMEM-safe on v7x as well)


def _round_up(x: int, m: int) -> int:
    return ((x + m - 1) // m) * m


def _cdiv(a: int, b: int) -> int:
    return (a + b - 1) // b


# ------------------------------------------------------------------ kernels ---
def _act(x, name):
    if name == "sin":
        return jnp.sin(x)
    if name == "sigmoid":
        return jax.nn.sigmoid(x)
    return jnp.tanh(x)


def _chain(z, w0_ref, b0_ref, wh_ref, bh_ref, d_in, n_layers, act, mxu_dtype):
    """One MLP chain: f32 VPU layer 0 (norm already folded in), MXU for the rest."""
    # layer 0: tiny-K -> d_in broadcast FMAs on the VPU, all f32
    h = b0_ref[...]                                   # (1, FEAT)
    for j in range(d_in):
        h = h + z[:, j:j + 1] * w0_ref[j:j + 1, :]    # (tm, FEAT)
    h = _act(h, act)
    # layers 1 .. n_layers-1 on the MXU (f32 accumulate, f32 bias/activation)
    for li in range(n_layers - 1):
        h = jnp.dot(h.astype(mxu_dtype), wh_ref[li],
                    preferred_element_type=jnp.float32)
        h = h + bh_ref[li]
        if li < n_layers - 2:
            h = _act(h, act)
    return h


def _make_fused_kernel(n_layers, act, d1, o1, o2, feat, mxu_dtype):
    """Single block-diagonal chain: model1 in lanes [0:feat//2], model2 above."""
    o_out = o1 + o2

    def kernel(z_ref, w0_ref, b0_ref, wh_ref, bh_ref, o_ref):
        z = z_ref[...]                                # (tm, d1) f32
        h = _chain(z, w0_ref, b0_ref, wh_ref, bh_ref, d1, n_layers, act, mxu_dtype)
        # exp() only on model2's output lanes [o1, o1+o2); mask from a (1,feat) iota
        lane = jax.lax.broadcasted_iota(jnp.int32, (1, feat), 1)
        is2 = (lane >= o1) & (lane < o1 + o2)
        out = jnp.where(is2, jnp.exp(h), h)
        o_ref[...] = out[:, :o_out]                   # narrow lane-store

    return kernel


def _make_two_chain_kernel(n1, n2, act1, act2, d1, d2, o1, o2, feat, mxu_dtype):
    """Fallback: two separate chains, narrow input, one packed narrow output."""
    o_out = o1 + o2

    def kernel(z_ref, w01, b01, wh1, bh1, w02, b02, wh2, bh2, o_ref):
        z = z_ref[...]
        h1 = _chain(z, w01, b01, wh1, bh1, d1, n1, act1, mxu_dtype)  # cols [0:o1]
        h2 = _chain(z, w02, b02, wh2, bh2, d2, n2, act2, mxu_dtype)  # cols [o1:o1+o2]
        lane = jax.lax.broadcasted_iota(jnp.int32, (1, feat), 1)
        is2 = (lane >= o1) & (lane < o1 + o2)
        out = jnp.where(is2, jnp.exp(h2), h1)
        o_ref[...] = out[:, :o_out]

    return kernel


# --------------------------------------------------------------- parameters ---
def init_parallel_net_params(key, layers1: List[int], layers2: List[int]):
    """Xavier-uniform weights, PyTorch-default uniform biases (deterministic)."""

    def init_net(key, layers):
        ws, bs = [], []
        for i in range(len(layers) - 1):
            fan_in, fan_out = layers[i], layers[i + 1]
            key, kw, kb = jax.random.split(key, 3)
            bound_w = math.sqrt(6.0 / (fan_in + fan_out))        # xavier_uniform_
            w = jax.random.uniform(kw, (fan_in, fan_out), jnp.float32,
                                   -bound_w, bound_w)             # stored (in, out)
            bound_b = 1.0 / math.sqrt(fan_in)                     # nn.Linear default
            b = jax.random.uniform(kb, (fan_out,), jnp.float32, -bound_b, bound_b)
            ws.append(w)
            bs.append(b)
        return key, ws, bs

    key, w1, b1 = init_net(key, layers1)
    key, w2, b2 = init_net(key, layers2)
    return {"w1": w1, "b1": b1, "w2": w2, "b2": b2}


# ----------------------------------------------------------- fusion packing ---
def _choose_fused_feat(params, act1, act2, max_feat=256):
    """Smallest FEAT in {128, 256} for which the block-diagonal fusion works."""
    w1s, w2s = params["w1"], params["w2"]
    if act1 != act2 or len(w1s) != len(w2s):
        return None
    o1 = w1s[-1].shape[1]
    o2 = w2s[-1].shape[1]
    hid1 = max(w.shape[1] for w in w1s[:-1])
    hid2 = max(w.shape[1] for w in w2s[:-1])
    for feat in (128, 256):
        if feat > max_feat:
            break
        half = feat // 2
        if hid1 <= half and hid2 <= half and o1 + o2 <= feat:
            return feat
    return None


def _norm_coeffs(lb, ub, d2):
    a1 = 2.0 / (ub - lb)
    c1 = -2.0 * lb / (ub - lb) - 1.0
    a2 = jnp.full((d2,), 2.0 / (ub[0] - lb[0]), jnp.float32)
    c2 = jnp.full((d2,), -2.0 * lb[0] / (ub[0] - lb[0]) - 1.0, jnp.float32)
    return a1, c1, a2, c2


def _pack_fused(params, lb, ub, d2, feat, mxu_dtype):
    """Block-diagonal weights; normalization folded into the f32 layer-0."""
    w1s, b1s = params["w1"], params["b1"]
    w2s, b2s = params["w2"], params["b2"]
    n_layers = len(w1s)
    half = feat // 2
    o1 = w1s[-1].shape[1]
    d1 = w1s[0].shape[0]
    a1, c1, a2, c2 = _norm_coeffs(lb, ub, d2)

    # layer 0 (stays f32; executed on the VPU in the kernel)
    w1_0 = jnp.asarray(w1s[0], jnp.float32); b1_0 = jnp.asarray(b1s[0], jnp.float32)
    w2_0 = jnp.asarray(w2s[0], jnp.float32); b2_0 = jnp.asarray(b2s[0], jnp.float32)
    W0 = jnp.zeros((d1, feat), jnp.float32)
    W0 = W0.at[:, :w1_0.shape[1]].set(a1[:, None] * w1_0)
    W0 = W0.at[:d2, half:half + w2_0.shape[1]].set(a2[:, None] * w2_0)
    B0 = jnp.zeros((1, feat), jnp.float32)
    B0 = B0.at[0, :w1_0.shape[1]].set(c1 @ w1_0 + b1_0)
    B0 = B0.at[0, half:half + w2_0.shape[1]].set(c2 @ w2_0 + b2_0)

    # layers 1..n_layers-1 stacked for the MXU
    whs, bhs = [], []
    for li in range(1, n_layers):
        w1 = jnp.asarray(w1s[li], jnp.float32); bb1 = jnp.asarray(b1s[li], jnp.float32)
        w2 = jnp.asarray(w2s[li], jnp.float32); bb2 = jnp.asarray(b2s[li], jnp.float32)
        co2 = half if li < n_layers - 1 else o1        # pack model2 outputs after model1's
        W = jnp.zeros((feat, feat), jnp.float32)
        W = W.at[:w1.shape[0], :w1.shape[1]].set(w1)
        W = W.at[half:half + w2.shape[0], co2:co2 + w2.shape[1]].set(w2)
        B = jnp.zeros((1, feat), jnp.float32)
        B = B.at[0, :w1.shape[1]].set(bb1)
        B = B.at[0, co2:co2 + w2.shape[1]].set(bb2)
        whs.append(W)
        bhs.append(B)
    WH = jnp.stack(whs).astype(mxu_dtype)              # (n_layers-1, feat, feat)
    BH = jnp.stack(bhs)                                 # (n_layers-1, 1, feat) f32
    return W0, B0, WH, BH


def _pack_two_chain(params, lb, ub, d2, feat, mxu_dtype):
    o1 = params["w1"][-1].shape[1]
    a1, c1, a2, c2 = _norm_coeffs(lb, ub, d2)

    def pack(ws, bs, a, c, col_off_last):
        n = len(ws)
        w0 = jnp.asarray(ws[0], jnp.float32); b0 = jnp.asarray(bs[0], jnp.float32)
        W0 = jnp.zeros((w0.shape[0], feat), jnp.float32).at[:, :w0.shape[1]].set(a[:, None] * w0)
        B0 = jnp.zeros((1, feat), jnp.float32).at[0, :w0.shape[1]].set(c @ w0 + b0)
        whs, bhs = [], []
        for li in range(1, n):
            w = jnp.asarray(ws[li], jnp.float32); b = jnp.asarray(bs[li], jnp.float32)
            co = col_off_last if li == n - 1 else 0
            whs.append(jnp.zeros((feat, feat), jnp.float32)
                       .at[:w.shape[0], co:co + w.shape[1]].set(w))
            bhs.append(jnp.zeros((1, feat), jnp.float32)
                       .at[0, co:co + w.shape[1]].set(b))
        return W0, B0, jnp.stack(whs).astype(mxu_dtype), jnp.stack(bhs)

    chain1 = pack(params["w1"], params["b1"], a1, c1, 0)
    chain2 = pack(params["w2"], params["b2"], a2, c2, o1)
    return chain1, chain2


# ----------------------------------------------------------------- forward ---
def parallel_net_forward(spatial: List[jnp.ndarray], time: jnp.ndarray,
                         params, lb, ub, output_names: List[str],
                         act1: str = "sin", act2: str = "sin",
                         mxu_dtype=jnp.bfloat16, tm_max: int = TM_MAX,
                         force_unfused: bool = False,
                         max_fuse_feat: int = 256) -> Dict[str, jnp.ndarray]:
    # glue: z1 = cat(spatial..., time); z2 is never materialized — model2
    # reads the spatial columns of z1 directly inside the kernel.
    z1 = jnp.concatenate([jnp.asarray(s, jnp.float32) for s in spatial]
                         + [jnp.asarray(time, jnp.float32)], axis=1)
    d2 = sum(int(s.shape[1]) for s in spatial)
    n, d1 = z1.shape

    lb = jnp.asarray(lb, jnp.float32)
    ub = jnp.asarray(ub, jnp.float32)
    o1 = params["w1"][-1].shape[1]
    o2 = params["w2"][-1].shape[1]
    o_out = o1 + o2
    n_layers1 = len(params["w1"])
    n_layers2 = len(params["w2"])
    assert n_layers1 >= 2 and n_layers2 >= 2, "need at least 2 linear layers per net"

    # ---- balanced batch tiling -------------------------------------------
    nr = _round_up(max(n, 8), 8)
    steps = _cdiv(nr, tm_max)
    if nr >= 1024:
        steps = max(steps, 2)            # let v7x's 2 TensorCores both work
    tm = _round_up(_cdiv(nr, steps), 8)
    n_pad = _round_up(n, tm)
    if n_pad != n:
        # explicit zero tail -> finite values through sin/exp on padded rows
        z1p = jnp.zeros((n_pad, d1), jnp.float32).at[:n].set(z1)
    else:
        z1p = z1

    # narrow row streams (last dim == full array dim, so the BlockSpec is legal)
    row_spec = pl.BlockSpec((tm, d1), lambda i: (i, 0))
    out_spec = pl.BlockSpec((tm, o_out), lambda i: (i, 0))

    feat = None if force_unfused else _choose_fused_feat(params, act1, act2, max_fuse_feat)
    if feat is not None:
        W0, B0, WH, BH = _pack_fused(params, lb, ub, d2, feat, mxu_dtype)
        kernel = _make_fused_kernel(n_layers1, act1, d1, o1, o2, feat, mxu_dtype)
        in_specs = [
            row_spec,
            pl.BlockSpec((d1, feat), lambda i: (0, 0)),                      # W0 (f32)
            pl.BlockSpec((1, feat), lambda i: (0, 0)),                       # B0
            pl.BlockSpec((n_layers1 - 1, feat, feat), lambda i: (0, 0, 0)),  # stacked W
            pl.BlockSpec((n_layers1 - 1, 1, feat), lambda i: (0, 0, 0)),     # stacked B
        ]
        args = (z1p, W0, B0, WH, BH)
    else:
        feat_g = _round_up(max([w.shape[1] for w in params["w1"]]
                               + [w.shape[1] for w in params["w2"]] + [o_out]), 128)
        (W01, B01, WH1, BH1), (W02, B02, WH2, BH2) = _pack_two_chain(
            params, lb, ub, d2, feat_g, mxu_dtype)
        kernel = _make_two_chain_kernel(n_layers1, n_layers2, act1, act2,
                                        d1, d2, o1, o2, feat_g, mxu_dtype)
        in_specs = [
            row_spec,
            pl.BlockSpec((d1, feat_g), lambda i: (0, 0)),
            pl.BlockSpec((1, feat_g), lambda i: (0, 0)),
            pl.BlockSpec((n_layers1 - 1, feat_g, feat_g), lambda i: (0, 0, 0)),
            pl.BlockSpec((n_layers1 - 1, 1, feat_g), lambda i: (0, 0, 0)),
            pl.BlockSpec((d2, feat_g), lambda i: (0, 0)),
            pl.BlockSpec((1, feat_g), lambda i: (0, 0)),
            pl.BlockSpec((n_layers2 - 1, feat_g, feat_g), lambda i: (0, 0, 0)),
            pl.BlockSpec((n_layers2 - 1, 1, feat_g), lambda i: (0, 0, 0)),
        ]
        args = (z1p, W01, B01, WH1, BH1, W02, B02, WH2, BH2)

    o_p = pl.pallas_call(
        kernel,
        out_shape=jax.ShapeDtypeStruct((n_pad, o_out), jnp.float32),
        grid_spec=pltpu.PrefetchScalarGridSpec(
            num_scalar_prefetch=0,
            grid=(n_pad // tm,),
            in_specs=in_specs,
            out_specs=out_spec,
        ),
        compiler_params=pltpu.CompilerParams(
            dimension_semantics=("parallel",)),
    )(*args)

    # packed narrow layout: cols [0:o1] = model1, cols [o1:o1+o2] = exp(model2)
    z = o_p[:n]
    return {name: z[:, i:i + 1] for i, name in enumerate(output_names)}


# --------------------------------------------------------- pure-JAX reference ---
def _reference_forward(spatial, time, params, lb, ub, output_names,
                       act1="sin", act2="sin"):
    lb = jnp.asarray(lb, jnp.float32)
    ub = jnp.asarray(ub, jnp.float32)
    z1 = jnp.concatenate(list(spatial) + [time], axis=1)
    z2 = jnp.concatenate(list(spatial), axis=1) if len(spatial) > 1 else spatial[0]
    z1 = 2.0 * (z1 - lb) / (ub - lb) - 1.0
    z2 = 2.0 * (z2 - lb[0]) / (ub[0] - lb[0]) - 1.0

    def run(h, ws, bs, act):
        for i, (w, b) in enumerate(zip(ws, bs)):
            h = h @ w + b
            if i < len(ws) - 1:
                h = _act(h, act)
        return h

    z1 = run(z1, params["w1"], params["b1"], act1)
    z2 = jnp.exp(run(z2, params["w2"], params["b2"], act2))
    z = jnp.concatenate([z1, z2], axis=1)
    return {name: z[:, i:i + 1] for i, name in enumerate(output_names)}


# -------------------------------------------------------------------- main ---
if __name__ == "__main__":
    key = jax.random.PRNGKey(0)

    # ParallelNet(layers1=[2,32,32,1], layers2=[1,32,32,1], lb, ub, ["u","v"])
    layers1 = [2, 32, 32, 1]       # model1: (x, t) -> 1 output
    layers2 = [1, 32, 32, 1]       # model2: (x,)   -> 1 output (then exp)
    lb = [-1.0, 0.0]               # bounds for (x, t)
    ub = [1.0, 2.0]
    output_names = ["u", "v"]

    key, kp, kx, kt = jax.random.split(key, 4)
    params = init_parallel_net_params(kp, layers1, layers2)

    n = 64
    x = jax.random.uniform(kx, (n, 1), jnp.float32, lb[0], ub[0])
    t = jax.random.uniform(kt, (n, 1), jnp.float32, lb[1], ub[1])

    ref = _reference_forward([x], t, params, lb, ub, output_names)

    # 1) default path: fused block-diagonal chain, f32 layer-0, bf16 MXU layers.
    out = parallel_net_forward([x], t, params, lb, ub, output_names)
    out = jax.tree_util.tree_map(jax.block_until_ready, out)
    for name in output_names:
        assert out[name].shape == (n, 1), (name, out[name].shape)
        assert jnp.allclose(out[name], ref[name], atol=1e-1, rtol=2e-1), name

    # 2) fused chain with f32 MXU: tight validation of packing/masking/folding.
    out32 = parallel_net_forward([x], t, params, lb, ub, output_names,
                                 mxu_dtype=jnp.float32)
    for name in output_names:
        assert jnp.allclose(out32[name], ref[name], atol=1e-4, rtol=1e-4), name

    # 3) generic two-chain fallback (f32): tight validation of the fallback path.
    outg = parallel_net_forward([x], t, params, lb, ub, output_names,
                                mxu_dtype=jnp.float32, force_unfused=True)
    for name in output_names:
        assert jnp.allclose(outg[name], ref[name], atol=1e-4, rtol=1e-4), name

    # 4) larger batch exercising a multi-step (>=2, balanced) grid + padded tail.
    nb = 3000
    key, kx2, kt2 = jax.random.split(key, 3)
    xb = jax.random.uniform(kx2, (nb, 1), jnp.float32, lb[0], ub[0])
    tb = jax.random.uniform(kt2, (nb, 1), jnp.float32, lb[1], ub[1])
    refb = _reference_forward([xb], tb, params, lb, ub, output_names)
    outb = parallel_net_forward([xb], tb, params, lb, ub, output_names)
    outb = jax.tree_util.tree_map(jax.block_until_ready, outb)
    for name in output_names:
        assert outb[name].shape == (nb, 1), (name, outb[name].shape)
        assert jnp.allclose(outb[name], refb[name], atol=1e-1, rtol=2e-1), name

    # TODO(synk): gradients through the bf16 MXU path are not validated here;
    # use mxu_dtype=jnp.float32 when evaluating PINN residuals/derivatives.
    print("KERNEL_OK")
</pallas_src>

<mosaic_0001>
module attributes {stable_mosaic.version = 11 : i64} {
  func.func @kernel(%arg0: i32, %arg1: memref<64x2xf32, #tpu.memory_space<vmem>>, %arg2: memref<2x128xf32, #tpu.memory_space<vmem>>, %arg3: memref<1x128xf32, #tpu.memory_space<vmem>>, %arg4: memref<2x128x128xbf16, #tpu.memory_space<vmem>>, %arg5: memref<2x1x128xf32, #tpu.memory_space<vmem>>, %arg6: memref<64x2xf32, #tpu.memory_space<vmem>>) attributes {dimension_semantics = [#tpu.dimension_semantics<parallel>], iteration_bounds = array<i64: 1>, scalar_prefetch = 0 : i64, scratch_operands = 0 : i64, tpu.core_type = #tpu.core_type<tc>, window_params = [{transform_indices = @transform_0, window_bounds = array<i64: 64, 2>}, {pipeline_mode = #tpu.pipeline_mode<synchronous>, transform_indices = @transform_1, window_bounds = array<i64: 2, 128>}, {pipeline_mode = #tpu.pipeline_mode<synchronous>, transform_indices = @transform_2, window_bounds = array<i64: 1, 128>}, {pipeline_mode = #tpu.pipeline_mode<synchronous>, transform_indices = @transform_3, window_bounds = array<i64: 2, 128, 128>}, {pipeline_mode = #tpu.pipeline_mode<synchronous>, transform_indices = @transform_4, window_bounds = array<i64: 2, 1, 128>}, {transform_indices = @transform_5, window_bounds = array<i64: 64, 2>}]} {
    %c0 = arith.constant 0 : index
    %c0_0 = arith.constant 0 : index
    %0 = vector.load %arg1[%c0, %c0_0] : memref<64x2xf32, #tpu.memory_space<vmem>>, vector<64x2xf32>
    %c0_1 = arith.constant 0 : index
    %c0_2 = arith.constant 0 : index
    %1 = vector.load %arg3[%c0_1, %c0_2] : memref<1x128xf32, #tpu.memory_space<vmem>>, vector<1x128xf32>
    %2 = vector.extract_strided_slice %0 {offsets = [0, 0], sizes = [64, 1], strides = [1, 1]} : vector<64x2xf32> to vector<64x1xf32>
    %c0_3 = arith.constant 0 : index
    %c0_4 = arith.constant 0 : index
    %3 = vector.load %arg2[%c0_3, %c0_4] : memref<2x128xf32, #tpu.memory_space<vmem>>, vector<1x128xf32>
    %4 = vector.broadcast %2 : vector<64x1xf32> to vector<64x128xf32>
    %5 = vector.broadcast %3 : vector<1x128xf32> to vector<64x128xf32>
    %6 = arith.mulf %4, %5 : vector<64x128xf32>
    %7 = vector.broadcast %1 : vector<1x128xf32> to vector<64x128xf32>
    %8 = arith.addf %7, %6 : vector<64x128xf32>
    %9 = vector.extract_strided_slice %0 {offsets = [0, 1], sizes = [64, 1], strides = [1, 1]} : vector<64x2xf32> to vector<64x1xf32>
    %c1 = arith.constant 1 : index
    %c0_5 = arith.constant 0 : index
    %10 = vector.load %arg2[%c1, %c0_5] : memref<2x128xf32, #tpu.memory_space<vmem>>, vector<1x128xf32>
    %11 = vector.broadcast %9 : vector<64x1xf32> to vector<64x128xf32>
    %12 = vector.broadcast %10 : vector<1x128xf32> to vector<64x128xf32>
    %13 = arith.mulf %11, %12 : vector<64x128xf32>
    %14 = arith.addf %8, %13 : vector<64x128xf32>
    %15 = math.sin %14 : vector<64x128xf32>
    %16 = arith.truncf %15 : vector<64x128xf32> to vector<64x128xbf16>
    %c0_6 = arith.constant 0 : index
    %c0_7 = arith.constant 0 : index
    %c0_8 = arith.constant 0 : index
    %17 = vector.load %arg4[%c0_6, %c0_7, %c0_8] : memref<2x128x128xbf16, #tpu.memory_space<vmem>>, vector<1x128x128xbf16>
    %18 = vector.shape_cast %17 : vector<1x128x128xbf16> to vector<128x128xbf16>
    %cst = arith.constant dense<0.000000e+00> : vector<64x128xf32>
    %19 = tpu.matmul %16, %18, %cst {dimension_numbers = #tpu.dot_dimension_numbers<[1], [0], [0], [1], [0, 0, 1, 1], [], []>} : vector<64x128xbf16>, vector<128x128xbf16>, vector<64x128xf32> -> vector<64x128xf32>
    %c0_9 = arith.constant 0 : index
    %c0_10 = arith.constant 0 : index
    %c0_11 = arith.constant 0 : index
    %20 = vector.load %arg5[%c0_9, %c0_10, %c0_11] : memref<2x1x128xf32, #tpu.memory_space<vmem>>, vector<1x1x128xf32>
    %21 = vector.shape_cast %20 : vector<1x1x128xf32> to vector<1x128xf32>
    %22 = vector.broadcast %21 : vector<1x128xf32> to vector<64x128xf32>
    %23 = arith.addf %19, %22 : vector<64x128xf32>
    %24 = math.sin %23 : vector<64x128xf32>
    %25 = arith.truncf %24 : vector<64x128xf32> to vector<64x128xbf16>
    %c1_12 = arith.constant 1 : index
    %c0_13 = arith.constant 0 : index
    %c0_14 = arith.constant 0 : index
    %26 = vector.load %arg4[%c1_12, %c0_13, %c0_14] : memref<2x128x128xbf16, #tpu.memory_space<vmem>>, vector<1x128x128xbf16>
    %27 = vector.shape_cast %26 : vector<1x128x128xbf16> to vector<128x128xbf16>
    %cst_15 = arith.constant dense<0.000000e+00> : vector<64x128xf32>
    %28 = tpu.matmul %25, %27, %cst_15 {dimension_numbers = #tpu.dot_dimension_numbers<[1], [0], [0], [1], [0, 0, 1, 1], [], []>} : vector<64x128xbf16>, vector<128x128xbf16>, vector<64x128xf32> -> vector<64x128xf32>
    %c1_16 = arith.constant 1 : index
    %c0_17 = arith.constant 0 : index
    %c0_18 = arith.constant 0 : index
    %29 = vector.load %arg5[%c1_16, %c0_17, %c0_18] : memref<2x1x128xf32, #tpu.memory_space<vmem>>, vector<1x1x128xf32>
    %30 = vector.shape_cast %29 : vector<1x1x128xf32> to vector<1x128xf32>
    %31 = vector.broadcast %30 : vector<1x128xf32> to vector<64x128xf32>
    %32 = arith.addf %28, %31 : vector<64x128xf32>
    %33 = tpu.iota {dimensions = array<i32: 1>} : vector<1x128xi32>
    %c1_i32 = arith.constant 1 : i32
    %34 = vector.broadcast %c1_i32 : i32 to vector<1x128xi32>
    %35 = arith.cmpi sge, %33, %34 : vector<1x128xi32>
    %c2_i32 = arith.constant 2 : i32
    %36 = vector.broadcast %c2_i32 : i32 to vector<1x128xi32>
    %37 = arith.cmpi slt, %33, %36 : vector<1x128xi32>
    %38 = arith.andi %35, %37 : vector<1x128xi1>
    %39 = math.exp %32 : vector<64x128xf32>
    %40 = vector.shape_cast %38 : vector<1x128xi1> to vector<1x128xi1>
    %41 = vector.broadcast %40 : vector<1x128xi1> to vector<64x128xi1>
    %42 = arith.select %41, %39, %32 : vector<64x128xi1>, vector<64x128xf32>
    %43 = vector.extract_strided_slice %42 {offsets = [0, 0], sizes = [64, 2], strides = [1, 1]} : vector<64x128xf32> to vector<64x2xf32>
    %c0_19 = arith.constant 0 : index
    %c0_20 = arith.constant 0 : index
    %44 = vector.load %arg6[%c0_19, %c0_20] : memref<64x2xf32, #tpu.memory_space<vmem>>, vector<64x2xf32>
    tpu.vector_store %arg6[%c0_19, %c0_20], %43 {strides = array<i32>} : memref<64x2xf32, #tpu.memory_space<vmem>>, vector<64x2xf32>,
    return
  }
  func.func @transform_0(%arg0: i32) -> (i32, i32) {
    %c0_i32 = arith.constant 0 : i32
    %c0_i32_0 = arith.constant 0 : i32
    return %arg0, %c0_i32 : i32, i32
  }
  func.func @transform_1(%arg0: i32) -> (i32, i32) {
    %c0_i32 = arith.constant 0 : i32
    %c0_i32_0 = arith.constant 0 : i32
    %c0_i32_1 = arith.constant 0 : i32
    return %c0_i32, %c0_i32_0 : i32, i32
  }
  func.func @transform_2(%arg0: i32) -> (i32, i32) {
    %c0_i32 = arith.constant 0 : i32
    %c0_i32_0 = arith.constant 0 : i32
    %c0_i32_1 = arith.constant 0 : i32
    return %c0_i32, %c0_i32_0 : i32, i32
  }
  func.func @transform_3(%arg0: i32) -> (i32, i32, i32) {
    %c0_i32 = arith.constant 0 : i32
    %c0_i32_0 = arith.constant 0 : i32
    %c0_i32_1 = arith.constant 0 : i32
    %c0_i32_2 = arith.constant 0 : i32
    return %c0_i32, %c0_i32_0, %c0_i32_1 : i32, i32, i32
  }
  func.func @transform_4(%arg0: i32) -> (i32, i32, i32) {
    %c0_i32 = arith.constant 0 : i32
    %c0_i32_0 = arith.constant 0 : i32
    %c0_i32_1 = arith.constant 0 : i32
    %c0_i32_2 = arith.constant 0 : i32
    return %c0_i32, %c0_i32_0, %c0_i32_1 : i32, i32, i32
  }
  func.func @transform_5(%arg0: i32) -> (i32, i32) {
    %c0_i32 = arith.constant 0 : i32
    %c0_i32_0 = arith.constant 0 : i32
    return %arg0, %c0_i32 : i32, i32
  }
}

</mosaic_0001>

<llo_original>
// kernel: tpu_custom_call.1
$region0: #{tpu_custom_call.1}
  #allocation0 [shape = 'u32[]', space=smem, size = 0x4, offset = 0x4, fixed_abs, tag = 'smem constant byte address 0x4 - core index']
  #allocation1 [shape = 'u32[144,128]{1,0:T(1,128)}', space=vmem, size = 0x12000, scoped, tag = 'internal scratch']
  %s0 = inlined_call_operand.vmem [shape: f32[64,2], index: 0, kind: input, shape index: {}]
  %s1 = inlined_call_operand.vmem [shape: f32[2,128], index: 1, kind: input, shape index: {}]
  %s2 = inlined_call_operand.vmem [shape: f32[1,128], index: 2, kind: input, shape index: {}]
  %s3 = inlined_call_operand.hbm [shape: bf16[2,128,128], index: 3, kind: input, shape index: {}]
  %s4 = inlined_call_operand.vmem [shape: f32[2,1,128], index: 4, kind: input, shape index: {}]
  %s5 = inlined_call_operand.vmem [shape: f32[64,2], index: 5, kind: output, shape index: {}]
  %s6 = sld [smem:[#allocation0]]
  $region34: #{tpu_custom_call.1} parent=0
    _
  %s8 = ssub.s32 1, %s6
  %s9 = scalar_select 0, %s8, %s6
  $region1: #{tpu_custom_call.1} parent=0
    #allocation2 [shape = 'u8[65536]{0}', space=vmem, size = 0x10000, scoped, tag = 'input window, operand 3, single buffered']
    #allocation3 [shape = 's32[1]{0}', space=sflag, size = 0x4, scoped, tag = 'scoped memory for tpu_custom_call.1']
    %10 = vsyncpa [#allocation3], 0
    // Predicated region
    $region2: #{tpu_custom_call.1} parent=1 // pred_check
      _
    $region3: #{tpu_custom_call.1} parent=1 // pred_check_branch
      %12 = sbr.rel (0) target = $region5
    $region4: #{tpu_custom_call.1} parent=1 // pred_region
      _
    $region5: #{tpu_custom_call.1} parent=1 // pred_fallthru
      _
    // Predicated region
    $region6: #{tpu_custom_call.1} parent=1 // pred_check
      _
    $region7: #{tpu_custom_call.1} parent=1 // pred_check_branch
      %14 = sbr.rel (0) target = $region9
    $region8: #{tpu_custom_call.1} parent=1 // pred_region
      _
    $region9: #{tpu_custom_call.1} parent=1 // pred_fallthru
      _
    // Predicated region
    $region10: #{tpu_custom_call.1} parent=1 // pred_check
      _
    $region11: #{tpu_custom_call.1} parent=1 // pred_check_branch
      %16 = sbr.rel (0) target = $region13
    $region12: #{tpu_custom_call.1} parent=1 // pred_region
      _
    $region13: #{tpu_custom_call.1} parent=1 // pred_fallthru
      _
    // Predicated region
    $region14: #{tpu_custom_call.1} parent=1 // pred_check
      _
    $region15: #{tpu_custom_call.1} parent=1 // pred_check_branch
      %18 = sbr.rel (0) target = $region17
    $region16: #{tpu_custom_call.1} parent=1 // pred_region
      %s20 = ssub.s32 2048, 2048
      %21 = vsyncadd [#allocation3], %s20
      %s22 = sshll.u32 [#allocation2], 4
      %s23 = int_to_ptr.vmem [resolvable:$true] %s22
      %28 = dma.hbm_to_vmem [thread:$0]  %s3, 2048, %s23, [#allocation3], 64, 64, 4
    $region17: #{tpu_custom_call.1} parent=1 // pred_fallthru
      _
    // Predicated region
    $region18: #{tpu_custom_call.1} parent=1 // pred_check
      _
    $region19: #{tpu_custom_call.1} parent=1 // pred_check_branch
      %30 = sbr.rel (0) target = $region21
    $region20: #{tpu_custom_call.1} parent=1 // pred_region
      _
    $region21: #{tpu_custom_call.1} parent=1 // pred_fallthru
      _
    // Predicated region
    $region22: #{tpu_custom_call.1} parent=1 // pred_check
      _
    $region23: #{tpu_custom_call.1} parent=1 // pred_check_branch
      %32 = sbr.rel (0) target = $region25
    $region24: #{tpu_custom_call.1} parent=1 // pred_region
      %33 = dma.done [#allocation3], 2048
    $region25: #{tpu_custom_call.1} parent=1 // pred_fallthru
      _
    %v35 = vld [vmem:[%s0] sm:$0xff]
    %v36 = vld [vmem:[%s0 + $0x8] sm:$0xff]
    %v37 = vld [vmem:[%s0 + $0x10] sm:$0xff]
    %v38 = vld [vmem:[%s0 + $0x18] sm:$0xff]
    %v39 = vld [vmem:[%s0 + $0x20] sm:$0xff]
    %v40 = vld [vmem:[%s0 + $0x28] sm:$0xff]
    %v41 = vld [vmem:[%s0 + $0x30] sm:$0xff]
    %v42 = vld [vmem:[%s0 + $0x38] sm:$0xff]
    %v43 = vld [vmem:[%s2] sm:$0x1]
    %v44 = vld [vmem:[%s1] sm:$0x1]
    %46 = vset.pattern.permute.xlu0 0
    %47 = vperm.xlu0 %46, %v35
    %v48 = vpop.permute.xlu0 %47
    %51 = vset.pattern.permute.xlu0 0
    %52 = vperm.xlu0 %51, %v36
    %v53 = vpop.permute.xlu0 %52
    %56 = vset.pattern.permute.xlu0 0
    %57 = vperm.xlu0 %56, %v37
    %v58 = vpop.permute.xlu0 %57
    %61 = vset.pattern.permute.xlu0 0
    %62 = vperm.xlu0 %61, %v38
    %v63 = vpop.permute.xlu0 %62
    %66 = vset.pattern.permute.xlu0 0
    %67 = vperm.xlu0 %66, %v39
    %v68 = vpop.permute.xlu0 %67
    %71 = vset.pattern.permute.xlu0 0
    %72 = vperm.xlu0 %71, %v40
    %v73 = vpop.permute.xlu0 %72
    %76 = vset.pattern.permute.xlu0 0
    %77 = vperm.xlu0 %76, %v41
    %v78 = vpop.permute.xlu0 %77
    %81 = vset.pattern.permute.xlu0 0
    %82 = vperm.xlu0 %81, %v42
    %v83 = vpop.permute.xlu0 %82
    %v85 = vlaneseq
    %v86 = vshrl.u32 %v85, 7
    %v87 = vsub.s32 0, %v86
    %v88 = vrot.slane %v44, %v87
    %v89 = vmul.f32 %v48, %v88
    %v90 = vmul.f32 %v53, %v88
    %v91 = vmul.f32 %v58, %v88
    %v92 = vmul.f32 %v63, %v88
    %v93 = vmul.f32 %v68, %v88
    %v94 = vmul.f32 %v73, %v88
    %v95 = vmul.f32 %v78, %v88
    %v96 = vmul.f32 %v83, %v88
    %v98 = vlaneseq
    %v99 = vshrl.u32 %v98, 7
    %v100 = vsub.s32 0, %v99
    %v101 = vrot.slane %v43, %v100
    %v103 = vadd.f32 %v101, %v89
    %v104 = vadd.f32 %v101, %v90
    %v105 = vadd.f32 %v101, %v91
    %v106 = vadd.f32 %v101, %v92
    %v107 = vadd.f32 %v101, %v93
    %v108 = vadd.f32 %v101, %v94
    %v109 = vadd.f32 %v101, %v95
    %v110 = vadd.f32 %v101, %v96
    %v111 = vld [vmem:[%s1 + $0x1] sm:$0x1]
    %112 = vset.pattern.permute.xlu0 1
    %113 = vperm.xlu0 %112, %v35
    %v114 = vpop.permute.xlu0 %113
    %116 = vset.pattern.permute.xlu0 1
    %117 = vperm.xlu0 %116, %v36
    %v118 = vpop.permute.xlu0 %117
    %120 = vset.pattern.permute.xlu0 1
    %121 = vperm.xlu0 %120, %v37
    %v122 = vpop.permute.xlu0 %121
    %124 = vset.pattern.permute.xlu0 1
    %125 = vperm.xlu0 %124, %v38
    %v126 = vpop.permute.xlu0 %125
    %128 = vset.pattern.permute.xlu0 1
    %129 = vperm.xlu0 %128, %v39
    %v130 = vpop.permute.xlu0 %129
    %132 = vset.pattern.permute.xlu0 1
    %133 = vperm.xlu0 %132, %v40
    %v134 = vpop.permute.xlu0 %133
    %136 = vset.pattern.permute.xlu0 1
    %137 = vperm.xlu0 %136, %v41
    %v138 = vpop.permute.xlu0 %137
    %140 = vset.pattern.permute.xlu0 1
    %141 = vperm.xlu0 %140, %v42
    %v142 = vpop.permute.xlu0 %141
    %v144 = vlaneseq
    %v145 = vshrl.u32 %v144, 7
    %v146 = vsub.s32 0, %v145
    %v147 = vrot.slane %v111, %v146
    %v148 = vmul.f32 %v114, %v147
    %v149 = vmul.f32 %v118, %v147
    %v150 = vmul.f32 %v122, %v147
    %v151 = vmul.f32 %v126, %v147
    %v152 = vmul.f32 %v130, %v147
    %v153 = vmul.f32 %v134, %v147
    %v154 = vmul.f32 %v138, %v147
    %v155 = vmul.f32 %v142, %v147
    %v156 = vadd.f32 %v103, %v148
    %v157 = vadd.f32 %v104, %v149
    %v158 = vadd.f32 %v105, %v150
    %v159 = vadd.f32 %v106, %v151
    %v160 = vadd.f32 %v107, %v152
    %v161 = vadd.f32 %v108, %v153
    %v162 = vadd.f32 %v109, %v154
    %v163 = vadd.f32 %v110, %v155
    %v164 = vand.u32 2147483647, %v156
    %vm165 = vcmp.le.f32.partialorder %v164, 0.7853982
    %vm166 = vcmp.lt.s32.totalorder %v156, 0
    %v167 = vand.u32 %v156, 2139095040
    %v168 = vshrl.u32 %v167, 23
    %v169 = vsub.s32 %v168, 127
    %v170 = vand.u32 2147483647, %v156
    %v171 = vand.u32 %v170, 8388607
    %v172 = vor.u32 %v171, 8388608
    %v173 = vsub.s32 0, %v172
    %v174 = vadd.s32 %v169, 1
    %vm175 = vcmp.gt.s32.totalorder %v174, 0
    %v176 = vsel %vm175, %v174, 0
    %v177 = vshrl.u32 %v176, 5
    %v178 = vand.u32 %v176, 31
    %v179 = vsub.s32 32, %v178
    %v180 = vshrl.u32 683565275, %v179
    %v181 = vshll.u32 683565275, %v178
    %v182 = vshrl.u32 2475754826, %v179
    %v183 = vor.u32 %v181, %v182
    %v184 = vshll.u32 2475754826, %v178
    %v185 = vshrl.u32 2131351028, %v179
    %v186 = vor.u32 %v184, %v185
    %v187 = vshll.u32 2131351028, %v178
    %v188 = vshrl.u32 2102212464, %v179
    %v189 = vor.u32 %v187, %v188
    %v190 = vshll.u32 2102212464, %v178
    %v191 = vshrl.u32 920167782, %v179
    %v192 = vor.u32 %v190, %v191
    %v193 = vshll.u32 920167782, %v178
    %v194 = vshrl.u32 1326507024, %v179
    %v195 = vor.u32 %v193, %v194
    %vm196 = vcmp.lt.s32.totalorder %v177, 1
    %vm197 = vcmp.lt.s32.totalorder %v177, 2
    %vm198 = vcmp.lt.s32.totalorder %v177, 3
    %vm199 = vcmp.lt.s32.totalorder %v177, 4
    %v200 = vsel %vm196, %v180, %v183
    %v201 = vsel %vm199, %v189, 2102212464
    %v202 = vsel %vm198, %v186, %v201
    %v203 = vsel %vm197, %v200, %v202
    %v204 = vsel %vm196, %v183, %v186
    %v205 = vsel %vm199, %v192, 920167782
    %v206 = vsel %vm198, %v189, %v205
    %v207 = vsel %vm197, %v204, %v206
    %v208 = vsel %vm196, %v186, %v189
    %v209 = vsel %vm199, %v195, 1326507024
    %v210 = vsel %vm198, %v192, %v209
    %v211 = vsel %vm197, %v208, %v210
    %v212 = vshll.u32 %v172, 8
    %v213 = vmul.u32.u64.compose %v212, %v211
    %v214 = vextract.low.u32 %v213
    %v215 = vextract.high.u32 %v213
    %v216 = vmul.u32.u64.compose %v212, %v207
    %v217 = vextract.low.u32 %v216
    %v218 = vextract.high.u32 %v216
    %v219 = vmul.u32 %v212, %v203
    %v220 = vadd.s32 %v215, %v217
    %vm221 = vc.u32 %v215, %v217
    %v222 = vadd.s32 %v218, 1
    %v223 = vsel %vm221, %v222, %v218
    %v224 = vadd.s32 %v219, %v223
    %v225 = vadd.s32 %v224, 536870912
    %v226 = vshrl.u32 %v225, 30
    %v227 = vshll.u32 %v226, 30
    %v228 = vsub.s32 %v224, %v227
    %vm229 = vcmp.lt.s32.totalorder %v228, 0
    %v230 = vsub.s32 0, %v228
    %v231 = vsel %vm229, %v230, %v228
    %v232 = vclz %v231
    %v233 = vsub.s32 %v232, 2
    %vm234 = vcmp.gt.s32.totalorder 0, %v233
    %v235 = vsel %vm234, 0, %v233
    %v236 = vsub.s32 32, %v235
    %v237 = vshll.u32 %v228, %v235
    %v238 = vshrl.u32 %v220, %v236
    %v239 = vor.u32 %v237, %v238
    %v240 = vsub.s32 4294967266, %v235
    %v241 = vadd.s32 %v240, 127
    %v242 = vshll.u32 %v241, 23
    %v243 = vor.u32 4788187, %v242
    %v244 = vand.u32 2147483647, %v243
    %v246 = vcvt.s32.f32 %v239
    %v247 = vmul.f32 %v246, %v244
    %v248 = vxor.u32 %v247, 2147483648
    %v249 = vsel %vm166, %v248, %v247
    %v250 = vsub.s32 4, %v226
    %v251 = vsel %vm166, %v250, %v226
    %v252 = vsel %vm165, %v156, %v249
    %v253 = vsel %vm165, 0, %v251
    %v254 = vcosq.f32.pop %v252
    %v255 = vsinq.f32.pop %v252
    %vm256 = vweird.f32 %v156
    %v257 = vadd.s32 %v253, 3
    %v258 = vand.u32 %v257, 3
    %vm259 = vcmp.lt.s32.totalorder %v258, 2
    %vm260 = vcmp.eq.s32.totalorder %v258, 0
    %v261 = vxor.u32 %v255, 2147483648
    %v262 = vsel %vm260, %v254, %v261
    %vm263 = vcmp.eq.s32.totalorder %v258, 2
    %v264 = vxor.u32 %v254, 2147483648
    %v265 = vsel %vm263, %v264, %v255
    %v266 = vsel %vm259, %v262, %v265
    %v267 = vsel %vm256, nan, %v266
    %v268 = vand.u32 2147483647, %v157
    %vm269 = vcmp.le.f32.partialorder %v268, 0.7853982
    %vm270 = vcmp.lt.s32.totalorder %v157, 0
    %v271 = vand.u32 %v157, 2139095040
    %v272 = vshrl.u32 %v271, 23
    %v273 = vsub.s32 %v272, 127
    %v274 = vand.u32 2147483647, %v157
    %v275 = vand.u32 %v274, 8388607
    %v276 = vor.u32 %v275, 8388608
    %v277 = vsub.s32 0, %v276
    %v278 = vadd.s32 %v273, 1
    %vm279 = vcmp.gt.s32.totalorder %v278, 0
    %v280 = vsel %vm279, %v278, 0
    %v281 = vshrl.u32 %v280, 5
    %v282 = vand.u32 %v280, 31
    %v283 = vsub.s32 32, %v282
    %v284 = vshrl.u32 683565275, %v283
    %v285 = vshll.u32 683565275, %v282
    %v286 = vshrl.u32 2475754826, %v283
    %v287 = vor.u32 %v285, %v286
    %v288 = vshll.u32 2475754826, %v282
    %v289 = vshrl.u32 2131351028, %v283
    %v290 = vor.u32 %v288, %v289
    %v291 = vshll.u32 2131351028, %v282
    %v292 = vshrl.u32 2102212464, %v283
    %v293 = vor.u32 %v291, %v292
    %v294 = vshll.u32 2102212464, %v282
    %v295 = vshrl.u32 920167782, %v283
    %v296 = vor.u32 %v294, %v295
    %v297 = vshll.u32 920167782, %v282
    %v298 = vshrl.u32 1326507024, %v283
    %v299 = vor.u32 %v297, %v298
    %vm300 = vcmp.lt.s32.totalorder %v281, 1
    %vm301 = vcmp.lt.s32.totalorder %v281, 2
    %vm302 = vcmp.lt.s32.totalorder %v281, 3
    %vm303 = vcmp.lt.s32.totalorder %v281, 4
    %v304 = vsel %vm300, %v284, %v287
    %v305 = vsel %vm303, %v293, 2102212464
    %v306 = vsel %vm302, %v290, %v305
    %v307 = vsel %vm301, %v304, %v306
    %v308 = vsel %vm300, %v287, %v290
    %v309 = vsel %vm303, %v296, 920167782
    %v310 = vsel %vm302, %v293, %v309
    %v311 = vsel %vm301, %v308, %v310
    %v312 = vsel %vm300, %v290, %v293
    %v313 = vsel %vm303, %v299, 1326507024
    %v314 = vsel %vm302, %v296, %v313
    %v315 = vsel %vm301, %v312, %v314
    %v316 = vshll.u32 %v276, 8
    %v317 = vmul.u32.u64.compose %v316, %v315
    %v318 = vextract.low.u32 %v317
    %v319 = vextract.high.u32 %v317
    %v320 = vmul.u32.u64.compose %v316, %v311
    %v321 = vextract.low.u32 %v320
    %v322 = vextract.high.u32 %v320
    %v323 = vmul.u32 %v316, %v307
    %v324 = vadd.s32 %v319, %v321
    %vm325 = vc.u32 %v319, %v321
    %v326 = vadd.s32 %v322, 1
    %v327 = vsel %vm325, %v326, %v322
    %v328 = vadd.s32 %v323, %v327
    %v329 = vadd.s32 %v328, 536870912
    %v330 = vshrl.u32 %v329, 30
    %v331 = vshll.u32 %v330, 30
    %v332 = vsub.s32 %v328, %v331
    %vm333 = vcmp.lt.s32.totalorder %v332, 0
    %v334 = vsub.s32 0, %v332
    %v335 = vsel %vm333, %v334, %v332
    %v336 = vclz %v335
    %v337 = vsub.s32 %v336, 2
    %vm338 = vcmp.gt.s32.totalorder 0, %v337
    %v339 = vsel %vm338, 0, %v337
    %v340 = vsub.s32 32, %v339
    %v341 = vshll.u32 %v332, %v339
    %v342 = vshrl.u32 %v324, %v340
    %v343 = vor.u32 %v341, %v342
    %v344 = vsub.s32 4294967266, %v339
    %v345 = vadd.s32 %v344, 127
    %v346 = vshll.u32 %v345, 23
    %v347 = vor.u32 4788187, %v346
    %v348 = vand.u32 2147483647, %v347
    %v350 = vcvt.s32.f32 %v343
    %v351 = vmul.f32 %v350, %v348
    %v352 = vxor.u32 %v351, 2147483648
    %v353 = vsel %vm270, %v352, %v351
    %v354 = vsub.s32 4, %v330
    %v355 = vsel %vm270, %v354, %v330
    %v356 = vsel %vm269, %v157, %v353
    %v357 = vsel %vm269, 0, %v355
    %v358 = vcosq.f32.pop %v356
    %v359 = vsinq.f32.pop %v356
    %vm360 = vweird.f32 %v157
    %v361 = vadd.s32 %v357, 3
    %v362 = vand.u32 %v361, 3
    %vm363 = vcmp.lt.s32.totalorder %v362, 2
    %vm364 = vcmp.eq.s32.totalorder %v362, 0
    %v365 = vxor.u32 %v359, 2147483648
    %v366 = vsel %vm364, %v358, %v365
    %vm367 = vcmp.eq.s32.totalorder %v362, 2
    %v368 = vxor.u32 %v358, 2147483648
    %v369 = vsel %vm367, %v368, %v359
    %v370 = vsel %vm363, %v366, %v369
    %v371 = vsel %vm360, nan, %v370
    %v372 = vand.u32 2147483647, %v158
    %vm373 = vcmp.le.f32.partialorder %v372, 0.7853982
    %vm374 = vcmp.lt.s32.totalorder %v158, 0
    %v375 = vand.u32 %v158, 2139095040
    %v376 = vshrl.u32 %v375, 23
    %v377 = vsub.s32 %v376, 127
    %v378 = vand.u32 2147483647, %v158
    %v379 = vand.u32 %v378, 8388607
    %v380 = vor.u32 %v379, 8388608
    %v381 = vsub.s32 0, %v380
    %v382 = vadd.s32 %v377, 1
    %vm383 = vcmp.gt.s32.totalorder %v382, 0
    %v384 = vsel %vm383, %v382, 0
    %v385 = vshrl.u32 %v384, 5
    %v386 = vand.u32 %v384, 31
    %v387 = vsub.s32 32, %v386
    %v388 = vshrl.u32 683565275, %v387
    %v389 = vshll.u32 683565275, %v386
    %v390 = vshrl.u32 2475754826, %v387
    %v391 = vor.u32 %v389, %v390
    %v392 = vshll.u32 2475754826, %v386
    %v393 = vshrl.u32 2131351028, %v387
    %v394 = vor.u32 %v392, %v393
    %v395 = vshll.u32 2131351028, %v386
    %v396 = vshrl.u32 2102212464, %v387
    %v397 = vor.u32 %v395, %v396
    %v398 = vshll.u32 2102212464, %v386
    %v399 = vshrl.u32 920167782, %v387
    %v400 = vor.u32 %v398, %v399
    %v401 = vshll.u32 920167782, %v386
    %v402 = vshrl.u32 1326507024, %v387
    %v403 = vor.u32 %v401, %v402
    %vm404 = vcmp.lt.s32.totalorder %v385, 1
    %vm405 = vcmp.lt.s32.totalorder %v385, 2
    %vm406 = vcmp.lt.s32.totalorder %v385, 3
    %vm407 = vcmp.lt.s32.totalorder %v385, 4
    %v408 = vsel %vm404, %v388, %v391
    %v409 = vsel %vm407, %v397, 2102212464
    %v410 = vsel %vm406, %v394, %v409
    %v411 = vsel %vm405, %v408, %v410
    %v412 = vsel %vm404, %v391, %v394
    %v413 = vsel %vm407, %v400, 920167782
    %v414 = vsel %vm406, %v397, %v413
    %v415 = vsel %vm405, %v412, %v414
    %v416 = vsel %vm404, %v394, %v397
    %v417 = vsel %vm407, %v403, 1326507024
    %v418 = vsel %vm406, %v400, %v417
    %v419 = vsel %vm405, %v416, %v418
    %v420 = vshll.u32 %v380, 8
    %v421 = vmul.u32.u64.compose %v420, %v419
    %v422 = vextract.low.u32 %v421
    %v423 = vextract.high.u32 %v421
    %v424 = vmul.u32.u64.compose %v420, %v415
    %v425 = vextract.low.u32 %v424
    %v426 = vextract.high.u32 %v424
    %v427 = vmul.u32 %v420, %v411
    %v428 = vadd.s32 %v423, %v425
    %vm429 = vc.u32 %v423, %v425
    %v430 = vadd.s32 %v426, 1
    %v431 = vsel %vm429, %v430, %v426
    %v432 = vadd.s32 %v427, %v431
    %v433 = vadd.s32 %v432, 536870912
    %v434 = vshrl.u32 %v433, 30
    %v435 = vshll.u32 %v434, 30
    %v436 = vsub.s32 %v432, %v435
    %vm437 = vcmp.lt.s32.totalorder %v436, 0
    %v438 = vsub.s32 0, %v436
    %v439 = vsel %vm437, %v438, %v436
    %v440 = vclz %v439
    %v441 = vsub.s32 %v440, 2
    %vm442 = vcmp.gt.s32.totalorder 0, %v441
    %v443 = vsel %vm442, 0, %v441
    %v444 = vsub.s32 32, %v443
    %v445 = vshll.u32 %v436, %v443
    %v446 = vshrl.u32 %v428, %v444
    %v447 = vor.u32 %v445, %v446
    %v448 = vsub.s32 4294967266, %v443
    %v449 = vadd.s32 %v448, 127
    %v450 = vshll.u32 %v449, 23
    %v451 = vor.u32 4788187, %v450
    %v452 = vand.u32 2147483647, %v451
    %v454 = vcvt.s32.f32 %v447
    %v455 = vmul.f32 %v454, %v452
    %v456 = vxor.u32 %v455, 2147483648
    %v457 = vsel %vm374, %v456, %v455
    %v458 = vsub.s32 4, %v434
    %v459 = vsel %vm374, %v458, %v434
    %v460 = vsel %vm373, %v158, %v457
    %v461 = vsel %vm373, 0, %v459
    %v462 = vcosq.f32.pop %v460
    %v463 = vsinq.f32.pop %v460
    %vm464 = vweird.f32 %v158
    %v465 = vadd.s32 %v461, 3
    %v466 = vand.u32 %v465, 3
    %vm467 = vcmp.lt.s32.totalorder %v466, 2
    %vm468 = vcmp.eq.s32.totalorder %v466, 0
    %v469 = vxor.u32 %v463, 2147483648
    %v470 = vsel %vm468, %v462, %v469
    %vm471 = vcmp.eq.s32.totalorder %v466, 2
    %v472 = vxor.u32 %v462, 2147483648
    %v473 = vsel %vm471, %v472, %v463
    %v474 = vsel %vm467, %v470, %v473
    %v475 = vsel %vm464, nan, %v474
    %v476 = vand.u32 2147483647, %v159
    %vm477 = vcmp.le.f32.partialorder %v476, 0.7853982
    %vm478 = vcmp.lt.s32.totalorder %v159, 0
    %v479 = vand.u32 %v159, 2139095040
    %v480 = vshrl.u32 %v479, 23
    %v481 = vsub.s32 %v480, 127
    %v482 = vand.u32 2147483647, %v159
    %v483 = vand.u32 %v482, 8388607
    %v484 = vor.u32 %v483, 8388608
    %v485 = vsub.s32 0, %v484
    %v486 = vadd.s32 %v481, 1
    %vm487 = vcmp.gt.s32.totalorder %v486, 0
    %v488 = vsel %vm487, %v486, 0
    %v489 = vshrl.u32 %v488, 5
    %v490 = vand.u32 %v488, 31
    %v491 = vsub.s32 32, %v490
    %v492 = vshrl.u32 683565275, %v491
    %v493 = vshll.u32 683565275, %v490
    %v494 = vshrl.u32 2475754826, %v491
    %v495 = vor.u32 %v493, %v494
    %v496 = vshll.u32 2475754826, %v490
    %v497 = vshrl.u32 2131351028, %v491
    %v498 = vor.u32 %v496, %v497
    %v499 = vshll.u32 2131351028, %v490
    %v500 = vshrl.u32 2102212464, %v491
    %v501 = vor.u32 %v499, %v500
    %v502 = vshll.u32 2102212464, %v490
    %v503 = vshrl.u32 920167782, %v491
    %v504 = vor.u32 %v502, %v503
    %v505 = vshll.u32 920167782, %v490
    %v506 = vshrl.u32 1326507024, %v491
    %v507 = vor.u32 %v505, %v506
    %vm508 = vcmp.lt.s32.totalorder %v489, 1
    %vm509 = vcmp.lt.s32.totalorder %v489, 2
    %vm510 = vcmp.lt.s32.totalorder %v489, 3
    %vm511 = vcmp.lt.s32.totalorder %v489, 4
    %v512 = vsel %vm508, %v492, %v495
    %v513 = vsel %vm511, %v501, 2102212464
    %v514 = vsel %vm510, %v498, %v513
    %v515 = vsel %vm509, %v512, %v514
    %v516 = vsel %vm508, %v495, %v498
    %v517 = vsel %vm511, %v504, 920167782
    %v518 = vsel %vm510, %v501, %v517
    %v519 = vsel %vm509, %v516, %v518
    %v520 = vsel %vm508, %v498, %v501
    %v521 = vsel %vm511, %v507, 1326507024
    %v522 = vsel %vm510, %v504, %v521
    %v523 = vsel %vm509, %v520, %v522
    %v524 = vshll.u32 %v484, 8
    %v525 = vmul.u32.u64.compose %v524, %v523
    %v526 = vextract.low.u32 %v525
    %v527 = vextract.high.u32 %v525
    %v528 = vmul.u32.u64.compose %v524, %v519
    %v529 = vextract.low.u32 %v528
    %v530 = vextract.high.u32 %v528
    %v531 = vmul.u32 %v524, %v515
    %v532 = vadd.s32 %v527, %v529
    %vm533 = vc.u32 %v527, %v529
    %v534 = vadd.s32 %v530, 1
    %v535 = vsel %vm533, %v534, %v530
    %v536 = vadd.s32 %v531, %v535
    %v537 = vadd.s32 %v536, 536870912
    %v538 = vshrl.u32 %v537, 30
    %v539 = vshll.u32 %v538, 30
    %v540 = vsub.s32 %v536, %v539
    %vm541 = vcmp.lt.s32.totalorder %v540, 0
    %v542 = vsub.s32 0, %v540
    %v543 = vsel %vm541, %v542, %v540
    %v544 = vclz %v543
    %v545 = vsub.s32 %v544, 2
    %vm546 = vcmp.gt.s32.totalorder 0, %v545
    %v547 = vsel %vm546, 0, %v545
    %v548 = vsub.s32 32, %v547
    %v549 = vshll.u32 %v540, %v547
    %v550 = vshrl.u32 %v532, %v548
    %v551 = vor.u32 %v549, %v550
    %v552 = vsub.s32 4294967266, %v547
    %v553 = vadd.s32 %v552, 127
    %v554 = vshll.u32 %v553, 23
    %v555 = vor.u32 4788187, %v554
    %v556 = vand.u32 2147483647, %v555
    %v558 = vcvt.s32.f32 %v551
    %v559 = vmul.f32 %v558, %v556
    %v560 = vxor.u32 %v559, 2147483648
    %v561 = vsel %vm478, %v560, %v559
    %v562 = vsub.s32 4, %v538
    %v563 = vsel %vm478, %v562, %v538
    %v564 = vsel %vm477, %v159, %v561
    %v565 = vsel %vm477, 0, %v563
    %v566 = vcosq.f32.pop %v564
    %v567 = vsinq.f32.pop %v564
    %vm568 = vweird.f32 %v159
    %v569 = vadd.s32 %v565, 3
    %v570 = vand.u32 %v569, 3
    %vm571 = vcmp.lt.s32.totalorder %v570, 2
    %vm572 = vcmp.eq.s32.totalorder %v570, 0
    %v573 = vxor.u32 %v567, 2147483648
    %v574 = vsel %vm572, %v566, %v573
    %vm575 = vcmp.eq.s32.totalorder %v570, 2
    %v576 = vxor.u32 %v566, 2147483648
    %v577 = vsel %vm575, %v576, %v567
    %v578 = vsel %vm571, %v574, %v577
    %v579 = vsel %vm568, nan, %v578
    %v580 = vand.u32 2147483647, %v160
    %vm581 = vcmp.le.f32.partialorder %v580, 0.7853982
    %vm582 = vcmp.lt.s32.totalorder %v160, 0
    %v583 = vand.u32 %v160, 2139095040
    %v584 = vshrl.u32 %v583, 23
    %v585 = vsub.s32 %v584, 127
    %v586 = vand.u32 2147483647, %v160
    %v587 = vand.u32 %v586, 8388607
    %v588 = vor.u32 %v587, 8388608
    %v589 = vsub.s32 0, %v588
    %v590 = vadd.s32 %v585, 1
    %vm591 = vcmp.gt.s32.totalorder %v590, 0
    %v592 = vsel %vm591, %v590, 0
    %v593 = vshrl.u32 %v592, 5
    %v594 = vand.u32 %v592, 31
    %v595 = vsub.s32 32, %v594
    %v596 = vshrl.u32 683565275, %v595
    %v597 = vshll.u32 683565275, %v594
    %v598 = vshrl.u32 2475754826, %v595
    %v599 = vor.u32 %v597, %v598
    %v600 = vshll.u32 2475754826, %v594
    %v601 = vshrl.u32 2131351028, %v595
    %v602 = vor.u32 %v600, %v601
    %v603 = vshll.u32 2131351028, %v594
    %v604 = vshrl.u32 2102212464, %v595
    %v605 = vor.u32 %v603, %v604
    %v606 = vshll.u32 2102212464, %v594
    %v607 = vshrl.u32 920167782, %v595
    %v608 = vor.u32 %v606, %v607
    %v609 = vshll.u32 920167782, %v594
    %v610 = vshrl.u32 1326507024, %v595
    %v611 = vor.u32 %v609, %v610
    %vm612 = vcmp.lt.s32.totalorder %v593, 1
    %vm613 = vcmp.lt.s32.totalorder %v593, 2
    %vm614 = vcmp.lt.s32.totalorder %v593, 3
    %vm615 = vcmp.lt.s32.totalorder %v593, 4
    %v616 = vsel %vm612, %v596, %v599
    %v617 = vsel %vm615, %v605, 2102212464
    %v618 = vsel %vm614, %v602, %v617
    %v619 = vsel %vm613, %v616, %v618
    %v620 = vsel %vm612, %v599, %v602
    %v621 = vsel %vm615, %v608, 920167782
    %v622 = vsel %vm614, %v605, %v621
    %v623 = vsel %vm613, %v620, %v622
    %v624 = vsel %vm612, %v602, %v605
    %v625 = vsel %vm615, %v611, 1326507024
    %v626 = vsel %vm614, %v608, %v625
    %v627 = vsel %vm613, %v624, %v626
    %v628 = vshll.u32 %v588, 8
    %v629 = vmul.u32.u64.compose %v628, %v627
    %v630 = vextract.low.u32 %v629
    %v631 = vextract.high.u32 %v629
    %v632 = vmul.u32.u64.compose %v628, %v623
    %v633 = vextract.low.u32 %v632
    %v634 = vextract.high.u32 %v632
    %v635 = vmul.u32 %v628, %v619
    %v636 = vadd.s32 %v631, %v633
    %vm637 = vc.u32 %v631, %v633
    %v638 = vadd.s32 %v634, 1
    %v639 = vsel %vm637, %v638, %v634
    %v640 = vadd.s32 %v635, %v639
    %v641 = vadd.s32 %v640, 536870912
    %v642 = vshrl.u32 %v641, 30
    %v643 = vshll.u32 %v642, 30
    %v644 = vsub.s32 %v640, %v643
    %vm645 = vcmp.lt.s32.totalorder %v644, 0
    %v646 = vsub.s32 0, %v644
    %v647 = vsel %vm645, %v646, %v644
    %v648 = vclz %v647
    %v649 = vsub.s32 %v648, 2
    %vm650 = vcmp.gt.s32.totalorder 0, %v649
    %v651 = vsel %vm650, 0, %v649
    %v652 = vsub.s32 32, %v651
    %v653 = vshll.u32 %v644, %v651
    %v654 = vshrl.u32 %v636, %v652
    %v655 = vor.u32 %v653, %v654
    %v656 = vsub.s32 4294967266, %v651
    %v657 = vadd.s32 %v656, 127
    %v658 = vshll.u32 %v657, 23
    %v659 = vor.u32 4788187, %v658
    %v660 = vand.u32 2147483647, %v659
    %v662 = vcvt.s32.f32 %v655
    %v663 = vmul.f32 %v662, %v660
    %v664 = vxor.u32 %v663, 2147483648
    %v665 = vsel %vm582, %v664, %v663
    %v666 = vsub.s32 4, %v642
    %v667 = vsel %vm582, %v666, %v642
    %v668 = vsel %vm581, %v160, %v665
    %v669 = vsel %vm581, 0, %v667
    %v670 = vcosq.f32.pop %v668
    %v671 = vsinq.f32.pop %v668
    %vm672 = vweird.f32 %v160
    %v673 = vadd.s32 %v669, 3
    %v674 = vand.u32 %v673, 3
    %vm675 = vcmp.lt.s32.totalorder %v674, 2
    %vm676 = vcmp.eq.s32.totalorder %v674, 0
    %v677 = vxor.u32 %v671, 2147483648
    %v678 = vsel %vm676, %v670, %v677
    %vm679 = vcmp.eq.s32.totalorder %v674, 2
    %v680 = vxor.u32 %v670, 2147483648
    %v681 = vsel %vm679, %v680, %v671
    %v682 = vsel %vm675, %v678, %v681
    %v683 = vsel %vm672, nan, %v682
    %v684 = vand.u32 2147483647, %v161
    %vm685 = vcmp.le.f32.partialorder %v684, 0.7853982
    %vm686 = vcmp.lt.s32.totalorder %v161, 0
    %v687 = vand.u32 %v161, 2139095040
    %v688 = vshrl.u32 %v687, 23
    %v689 = vsub.s32 %v688, 127
    %v690 = vand.u32 2147483647, %v161
    %v691 = vand.u32 %v690, 8388607
    %v692 = vor.u32 %v691, 8388608
    %v693 = vsub.s32 0, %v692
    %v694 = vadd.s32 %v689, 1
    %vm695 = vcmp.gt.s32.totalorder %v694, 0
    %v696 = vsel %vm695, %v694, 0
    %v697 = vshrl.u32 %v696, 5
    %v698 = vand.u32 %v696, 31
    %v699 = vsub.s32 32, %v698
    %v700 = vshrl.u32 683565275, %v699
    %v701 = vshll.u32 683565275, %v698
    %v702 = vshrl.u32 2475754826, %v699
    %v703 = vor.u32 %v701, %v702
    %v704 = vshll.u32 2475754826, %v698
    %v705 = vshrl.u32 2131351028, %v699
    %v706 = vor.u32 %v704, %v705
    %v707 = vshll.u32 2131351028, %v698
    %v708 = vshrl.u32 2102212464, %v699
    %v709 = vor.u32 %v707, %v708
    %v710 = vshll.u32 2102212464, %v698
    %v711 = vshrl.u32 920167782, %v699
    %v712 = vor.u32 %v710, %v711
    %v713 = vshll.u32 920167782, %v698
    %v714 = vshrl.u32 1326507024, %v699
    %v715 = vor.u32 %v713, %v714
    %vm716 = vcmp.lt.s32.totalorder %v697, 1
    %vm717 = vcmp.lt.s32.totalorder %v697, 2
    %vm718 = vcmp.lt.s32.totalorder %v697, 3
    %vm719 = vcmp.lt.s32.totalorder %v697, 4
    %v720 = vsel %vm716, %v700, %v703
    %v721 = vsel %vm719, %v709, 2102212464
    %v722 = vsel %vm718, %v706, %v721
    %v723 = vsel %vm717, %v720, %v722
    %v724 = vsel %vm716, %v703, %v706
    %v725 = vsel %vm719, %v712, 920167782
    %v726 = vsel %vm718, %v709, %v725
    %v727 = vsel %vm717, %v724, %v726
    %v728 = vsel %vm716, %v706, %v709
    %v729 = vsel %vm719, %v715, 1326507024
    %v730 = vsel %vm718, %v712, %v729
    %v731 = vsel %vm717, %v728, %v730
    %v732 = vshll.u32 %v692, 8
    %v733 = vmul.u32.u64.compose %v732, %v731
    %v734 = vextract.low.u32 %v733
    %v735 = vextract.high.u32 %v733
    %v736 = vmul.u32.u64.compose %v732, %v727
    %v737 = vextract.low.u32 %v736
    %v738 = vextract.high.u32 %v736
    %v739 = vmul.u32 %v732, %v723
    %v740 = vadd.s32 %v735, %v737
    %vm741 = vc.u32 %v735, %v737
    %v742 = vadd.s32 %v738, 1
    %v743 = vsel %vm741, %v742, %v738
    %v744 = vadd.s32 %v739, %v743
    %v745 = vadd.s32 %v744, 536870912
    %v746 = vshrl.u32 %v745, 30
    %v747 = vshll.u32 %v746, 30
    %v748 = vsub.s32 %v744, %v747
    %vm749 = vcmp.lt.s32.totalorder %v748, 0
    %v750 = vsub.s32 0, %v748
    %v751 = vsel %vm749, %v750, %v748
    %v752 = vclz %v751
    %v753 = vsub.s32 %v752, 2
    %vm754 = vcmp.gt.s32.totalorder 0, %v753
    %v755 = vsel %vm754, 0, %v753
    %v756 = vsub.s32 32, %v755
    %v757 = vshll.u32 %v748, %v755
    %v758 = vshrl.u32 %v740, %v756
    %v759 = vor.u32 %v757, %v758
    %v760 = vsub.s32 4294967266, %v755
    %v761 = vadd.s32 %v760, 127
    %v762 = vshll.u32 %v761, 23
    %v763 = vor.u32 4788187, %v762
    %v764 = vand.u32 2147483647, %v763
    %v766 = vcvt.s32.f32 %v759
    %v767 = vmul.f32 %v766, %v764
    %v768 = vxor.u32 %v767, 2147483648
    %v769 = vsel %vm686, %v768, %v767
    %v770 = vsub.s32 4, %v746
    %v771 = vsel %vm686, %v770, %v746
    %v772 = vsel %vm685, %v161, %v769
    %v773 = vsel %vm685, 0, %v771
    %v774 = vcosq.f32.pop %v772
    %v775 = vsinq.f32.pop %v772
    %vm776 = vweird.f32 %v161
    %v777 = vadd.s32 %v773, 3
    %v778 = vand.u32 %v777, 3
    %vm779 = vcmp.lt.s32.totalorder %v778, 2
    %vm780 = vcmp.eq.s32.totalorder %v778, 0
    %v781 = vxor.u32 %v775, 2147483648
    %v782 = vsel %vm780, %v774, %v781
    %vm783 = vcmp.eq.s32.totalorder %v778, 2
    %v784 = vxor.u32 %v774, 2147483648
    %v785 = vsel %vm783, %v784, %v775
    %v786 = vsel %vm779, %v782, %v785
    %v787 = vsel %vm776, nan, %v786
    %v788 = vand.u32 2147483647, %v162
    %vm789 = vcmp.le.f32.partialorder %v788, 0.7853982
    %vm790 = vcmp.lt.s32.totalorder %v162, 0
    %v791 = vand.u32 %v162, 2139095040
    %v792 = vshrl.u32 %v791, 23
    %v793 = vsub.s32 %v792, 127
    %v794 = vand.u32 2147483647, %v162
    %v795 = vand.u32 %v794, 8388607
    %v796 = vor.u32 %v795, 8388608
    %v797 = vsub.s32 0, %v796
    %v798 = vadd.s32 %v793, 1
    %vm799 = vcmp.gt.s32.totalorder %v798, 0
    %v800 = vsel %vm799, %v798, 0
    %v801 = vshrl.u32 %v800, 5
    %v802 = vand.u32 %v800, 31
    %v803 = vsub.s32 32, %v802
    %v804 = vshrl.u32 683565275, %v803
    %v805 = vshll.u32 683565275, %v802
    %v806 = vshrl.u32 2475754826, %v803
    %v807 = vor.u32 %v805, %v806
    %v808 = vshll.u32 2475754826, %v802
    %v809 = vshrl.u32 2131351028, %v803
    %v810 = vor.u32 %v808, %v809
    %v811 = vshll.u32 2131351028, %v802
    %v812 = vshrl.u32 2102212464, %v803
    %v813 = vor.u32 %v811, %v812
    %v814 = vshll.u32 2102212464, %v802
    %v815 = vshrl.u32 920167782, %v803
    %v816 = vor.u32 %v814, %v815
    %v817 = vshll.u32 920167782, %v802
    %v818 = vshrl.u32 1326507024, %v803
    %v819 = vor.u32 %v817, %v818
    %vm820 = vcmp.lt.s32.totalorder %v801, 1
    %vm821 = vcmp.lt.s32.totalorder %v801, 2
    %vm822 = vcmp.lt.s32.totalorder %v801, 3
    %vm823 = vcmp.lt.s32.totalorder %v801, 4
    %v824 = vsel %vm820, %v804, %v807
    %v825 = vsel %vm823, %v813, 2102212464
    %v826 = vsel %vm822, %v810, %v825
    %v827 = vsel %vm821, %v824, %v826
    %v828 = vsel %vm820, %v807, %v810
    %v829 = vsel %vm823, %v816, 920167782
    %v830 = vsel %vm822, %v813, %v829
    %v831 = vsel %vm821, %v828, %v830
    %v832 = vsel %vm820, %v810, %v813
    %v833 = vsel %vm823, %v819, 1326507024
    %v834 = vsel %vm822, %v816, %v833
    %v835 = vsel %vm821, %v832, %v834
    %v836 = vshll.u32 %v796, 8
    %v837 = vmul.u32.u64.compose %v836, %v835
    %v838 = vextract.low.u32 %v837
    %v839 = vextract.high.u32 %v837
    %v840 = vmul.u32.u64.compose %v836, %v831
    %v841 = vextract.low.u32 %v840
    %v842 = vextract.high.u32 %v840
    %v843 = vmul.u32 %v836, %v827
    %v844 = vadd.s32 %v839, %v841
    %vm845 = vc.u32 %v839, %v841
    %v846 = vadd.s32 %v842, 1
    %v847 = vsel %vm845, %v846, %v842
    %v848 = vadd.s32 %v843, %v847
    %v849 = vadd.s32 %v848, 536870912
    %v850 = vshrl.u32 %v849, 30
    %v851 = vshll.u32 %v850, 30
    %v852 = vsub.s32 %v848, %v851
    %vm853 = vcmp.lt.s32.totalorder %v852, 0
    %v854 = vsub.s32 0, %v852
    %v855 = vsel %vm853, %v854, %v852
    %v856 = vclz %v855
    %v857 = vsub.s32 %v856, 2
    %vm858 = vcmp.gt.s32.totalorder 0, %v857
    %v859 = vsel %vm858, 0, %v857
    %v860 = vsub.s32 32, %v859
    %v861 = vshll.u32 %v852, %v859
    %v862 = vshrl.u32 %v844, %v860
    %v863 = vor.u32 %v861, %v862
    %v864 = vsub.s32 4294967266, %v859
    %v865 = vadd.s32 %v864, 127
    %v866 = vshll.u32 %v865, 23
    %v867 = vor.u32 4788187, %v866
    %v868 = vand.u32 2147483647, %v867
    %v870 = vcvt.s32.f32 %v863
    %v871 = vmul.f32 %v870, %v868
    %v872 = vxor.u32 %v871, 2147483648
    %v873 = vsel %vm790, %v872, %v871
    %v874 = vsub.s32 4, %v850
    %v875 = vsel %vm790, %v874, %v850
    %v876 = vsel %vm789, %v162, %v873
    %v877 = vsel %vm789, 0, %v875
    %v878 = vcosq.f32.pop %v876
    %v879 = vsinq.f32.pop %v876
    %vm880 = vweird.f32 %v162
    %v881 = vadd.s32 %v877, 3
    %v882 = vand.u32 %v881, 3
    %vm883 = vcmp.lt.s32.totalorder %v882, 2
    %vm884 = vcmp.eq.s32.totalorder %v882, 0
    %v885 = vxor.u32 %v879, 2147483648
    %v886 = vsel %vm884, %v878, %v885
    %vm887 = vcmp.eq.s32.totalorder %v882, 2
    %v888 = vxor.u32 %v878, 2147483648
    %v889 = vsel %vm887, %v888, %v879
    %v890 = vsel %vm883, %v886, %v889
    %v891 = vsel %vm880, nan, %v890
    %v892 = vand.u32 2147483647, %v163
    %vm893 = vcmp.le.f32.partialorder %v892, 0.7853982
    %vm894 = vcmp.lt.s32.totalorder %v163, 0
    %v895 = vand.u32 %v163, 2139095040
    %v896 = vshrl.u32 %v895, 23
    %v897 = vsub.s32 %v896, 127
    %v898 = vand.u32 2147483647, %v163
    %v899 = vand.u32 %v898, 8388607
    %v900 = vor.u32 %v899, 8388608
    %v901 = vsub.s32 0, %v900
    %v902 = vadd.s32 %v897, 1
    %vm903 = vcmp.gt.s32.totalorder %v902, 0
    %v904 = vsel %vm903, %v902, 0
    %v905 = vshrl.u32 %v904, 5
    %v906 = vand.u32 %v904, 31
    %v907 = vsub.s32 32, %v906
    %v908 = vshrl.u32 683565275, %v907
    %v909 = vshll.u32 683565275, %v906
    %v910 = vshrl.u32 2475754826, %v907
    %v911 = vor.u32 %v909, %v910
    %v912 = vshll.u32 2475754826, %v906
    %v913 = vshrl.u32 2131351028, %v907
    %v914 = vor.u32 %v912, %v913
    %v915 = vshll.u32 2131351028, %v906
    %v916 = vshrl.u32 2102212464, %v907
    %v917 = vor.u32 %v915, %v916
    %v918 = vshll.u32 2102212464, %v906
    %v919 = vshrl.u32 920167782, %v907
    %v920 = vor.u32 %v918, %v919
    %v921 = vshll.u32 920167782, %v906
    %v922 = vshrl.u32 1326507024, %v907
    %v923 = vor.u32 %v921, %v922
    %vm924 = vcmp.lt.s32.totalorder %v905, 1
    %vm925 = vcmp.lt.s32.totalorder %v905, 2
    %vm926 = vcmp.lt.s32.totalorder %v905, 3
    %vm927 = vcmp.lt.s32.totalorder %v905, 4
    %v928 = vsel %vm924, %v908, %v911
    %v929 = vsel %vm927, %v917, 2102212464
    %v930 = vsel %vm926, %v914, %v929
    %v931 = vsel %vm925, %v928, %v930
    %v932 = vsel %vm924, %v911, %v914
    %v933 = vsel %vm927, %v920, 920167782
    %v934 = vsel %vm926, %v917, %v933
    %v935 = vsel %vm925, %v932, %v934
    %v936 = vsel %vm924, %v914, %v917
    %v937 = vsel %vm927, %v923, 1326507024
    %v938 = vsel %vm926, %v920, %v937
    %v939 = vsel %vm925, %v936, %v938
    %v940 = vshll.u32 %v900, 8
    %v941 = vmul.u32.u64.compose %v940, %v939
    %v942 = vextract.low.u32 %v941
    %v943 = vextract.high.u32 %v941
    %v944 = vmul.u32.u64.compose %v940, %v935
    %v945 = vextract.low.u32 %v944
    %v946 = vextract.high.u32 %v944
    %v947 = vmul.u32 %v940, %v931
    %v948 = vadd.s32 %v943, %v945
    %vm949 = vc.u32 %v943, %v945
    %v950 = vadd.s32 %v946, 1
    %v951 = vsel %vm949, %v950, %v946
    %v952 = vadd.s32 %v947, %v951
    %v953 = vadd.s32 %v952, 536870912
    %v954 = vshrl.u32 %v953, 30
    %v955 = vshll.u32 %v954, 30
    %v956 = vsub.s32 %v952, %v955
    %vm957 = vcmp.lt.s32.totalorder %v956, 0
    %v958 = vsub.s32 0, %v956
    %v959 = vsel %vm957, %v958, %v956
    %v960 = vclz %v959
    %v961 = vsub.s32 %v960, 2
    %vm962 = vcmp.gt.s32.totalorder 0, %v961
    %v963 = vsel %vm962, 0, %v961
    %v964 = vsub.s32 32, %v963
    %v965 = vshll.u32 %v956, %v963
    %v966 = vshrl.u32 %v948, %v964
    %v967 = vor.u32 %v965, %v966
    %v968 = vsub.s32 4294967266, %v963
    %v969 = vadd.s32 %v968, 127
    %v970 = vshll.u32 %v969, 23
    %v971 = vor.u32 4788187, %v970
    %v972 = vand.u32 2147483647, %v971
    %v974 = vcvt.s32.f32 %v967
    %v975 = vmul.f32 %v974, %v972
    %v976 = vxor.u32 %v975, 2147483648
    %v977 = vsel %vm894, %v976, %v975
    %v978 = vsub.s32 4, %v954
    %v979 = vsel %vm894, %v978, %v954
    %v980 = vsel %vm893, %v163, %v977
    %v981 = vsel %vm893, 0, %v979
    %v982 = vcosq.f32.pop %v980
    %v983 = vsinq.f32.pop %v980
    %vm984 = vweird.f32 %v163
    %v985 = vadd.s32 %v981, 3
    %v986 = vand.u32 %v985, 3
    %vm987 = vcmp.lt.s32.totalorder %v986, 2
    %vm988 = vcmp.eq.s32.totalorder %v986, 0
    %v989 = vxor.u32 %v983, 2147483648
    %v990 = vsel %vm988, %v982, %v989
    %vm991 = vcmp.eq.s32.totalorder %v986, 2
    %v992 = vxor.u32 %v982, 2147483648
    %v993 = vsel %vm991, %v992, %v983
    %v994 = vsel %vm987, %v990, %v993
    %v995 = vsel %vm984, nan, %v994
    %v996 = vpack.c.bf16 %v371, %v267
    %v997 = vpack.c.bf16 %v579, %v475
    %v998 = vpack.c.bf16 %v787, %v683
    %v999 = vpack.c.bf16 %v995, %v891
    %v1000 = vld [vmem:[#allocation2] sm:$0xf]
    %v1001 = vld [vmem:[#allocation2 + $0x4] sm:$0xf]
    %v1002 = vld [vmem:[#allocation2 + $0x8] sm:$0xf]
    %v1003 = vld [vmem:[#allocation2 + $0xc] sm:$0xf]
    %v1004 = vld [vmem:[#allocation2 + $0x10] sm:$0xf]
    %v1005 = vld [vmem:[#allocation2 + $0x14] sm:$0xf]
    %v1006 = vld [vmem:[#allocation2 + $0x18] sm:$0xf]
    %v1007 = vld [vmem:[#allocation2 + $0x1c] sm:$0xf]
    %v1008 = vld [vmem:[#allocation2 + $0x20] sm:$0xf]
    %v1009 = vld [vmem:[#allocation2 + $0x24] sm:$0xf]
    %v1010 = vld [vmem:[#allocation2 + $0x28] sm:$0xf]
    %v1011 = vld [vmem:[#allocation2 + $0x2c] sm:$0xf]
    %v1012 = vld [vmem:[#allocation2 + $0x30] sm:$0xf]
    %v1013 = vld [vmem:[#allocation2 + $0x34] sm:$0xf]
    %v1014 = vld [vmem:[#allocation2 + $0x38] sm:$0xf]
    %v1015 = vld [vmem:[#allocation2 + $0x3c] sm:$0xf]
    %v1016 = vld [vmem:[%s4] sm:$0x1]
    %v1018 = vlaneseq
    %v1019 = vshrl.u32 %v1018, 7
    %v1020 = vsub.s32 0, %v1019
    %v1021 = vrot.slane %v1016, %v1020
    %v1039 = vunpack.c.l.b16 %v1000
    %v1040 = vunpack.c.l.b16 %v1001
    %v1041 = vunpack.c.l.b16 %v1002
    %v1042 = vunpack.c.l.b16 %v1003
    %v1043 = vunpack.c.l.b16 %v1004
    %v1044 = vunpack.c.l.b16 %v1005
    %v1045 = vunpack.c.l.b16 %v1006
    %v1046 = vunpack.c.l.b16 %v1007
    %v1047 = vunpack.c.l.b16 %v1008
    %v1048 = vunpack.c.l.b16 %v1009
    %v1049 = vunpack.c.l.b16 %v1010
    %v1050 = vunpack.c.l.b16 %v1011
    %v1051 = vunpack.c.l.b16 %v1012
    %v1052 = vunpack.c.l.b16 %v1013
    %v1053 = vunpack.c.l.b16 %v1014
    %v1054 = vunpack.c.l.b16 %v1015
    %v1055 = vpack.c.b16 %v1040, %v1039
    %v1056 = vpack.c.b16 %v1042, %v1041
    %v1057 = vpack.c.b16 %v1044, %v1043
    %v1058 = vpack.c.b16 %v1046, %v1045
    %v1059 = vpack.c.b16 %v1048, %v1047
    %v1060 = vpack.c.b16 %v1050, %v1049
    %v1061 = vpack.c.b16 %v1052, %v1051
    %v1062 = vpack.c.b16 %v1054, %v1053
    %1071 = vmatprep.subr.bf16.mxu0 0
    %1072 = vmatpush1.bf16.msra.mxu0 %v1062
    %1073 = vmatprep.subr.bf16.mxu0 0
    %1074 = vmatpush1.bf16.msra.mxu0 %v1061
    %1075 = vmatprep.subr.bf16.mxu0 0
    %1076 = vmatpush1.bf16.msra.mxu0 %v1060
    %1077 = vmatprep.subr.bf16.mxu0 0
    %1078 = vmatpush1.bf16.msra.mxu0 %v1059
    %1079 = vmatprep.subr.bf16.mxu0 0
    %1080 = vmatpush1.bf16.msra.mxu0 %v1058
    %1081 = vmatprep.subr.bf16.mxu0 0
    %1082 = vmatpush1.bf16.msra.mxu0 %v1057
    %1083 = vmatprep.subr.bf16.mxu0 0
    %1084 = vmatpush1.bf16.msra.mxu0 %v1056
    %1085 = vmatprep.subr.bf16.mxu0 0
    %1086 = vmatpush1.bf16.msra.mxu0 %v1055
    %1087 = vmatprep.subr.bf16.mxu0 0
    %1088 = vmatpush2.bf16.msra.mxu0 0
    %1089 = vmatprep.subr.bf16.mxu0 0
    %1090 = vmatpush2.bf16.msra.mxu0 0
    %1091 = vmatprep.subr.bf16.mxu0 0
    %1092 = vmatpush2.bf16.msra.mxu0 0
    %1093 = vmatprep.subr.bf16.mxu0 0
    %1094 = vmatpush2.bf16.msra.mxu0 0
    %1095 = vmatprep.subr.bf16.mxu0 0
    %1096 = vmatpush2.bf16.msra.mxu0 0
    %1097 = vmatprep.subr.bf16.mxu0 0
    %1098 = vmatpush2.bf16.msra.mxu0 0
    %1099 = vmatprep.subr.bf16.mxu0 0
    %1100 = vmatpush2.bf16.msra.mxu0 0
    %1101 = vmatprep.subr.bf16.mxu0 0
    %1102 = vmatpush2.bf16.msra.mxu0 0
    %1103 = vmatprep.mubr.bf16.mxu0 0
    %1104 = vmatmul.mubr.bf16.gmra.mxu0 %v996
    %v1105 = vpop.f32.mrf.mxu0
    %v1106 = vadd.f32 %v1021, %v1105
    %v1107 = vpop.f32.mrf.mxu0
    %v1108 = vpop.f32.mrf.mxu0
    %v1109 = vadd.f32 %v1021, %v1108
    %v1110 = vpop.f32.mrf.mxu0
    %1111 = vmatprep.mubr.bf16.mxu0 0
    %1112 = vmatmul.mubr.bf16.gmra.mxu0 %v997
    %v1113 = vpop.f32.mrf.mxu0
    %v1114 = vadd.f32 %v1021, %v1113
    %v1115 = vpop.f32.mrf.mxu0
    %v1116 = vpop.f32.mrf.mxu0
    %v1117 = vadd.f32 %v1021, %v1116
    %v1118 = vpop.f32.mrf.mxu0
    %1119 = vmatprep.mubr.bf16.mxu0 0
    %1120 = vmatmul.mubr.bf16.gmra.mxu0 %v998
    %v1121 = vpop.f32.mrf.mxu0
    %v1122 = vadd.f32 %v1021, %v1121
    %v1123 = vpop.f32.mrf.mxu0
    %v1124 = vpop.f32.mrf.mxu0
    %v1125 = vadd.f32 %v1021, %v1124
    %v1126 = vpop.f32.mrf.mxu0
    %1127 = vmatprep.mubr.bf16.mxu0 0
    %1128 = vmatmul.mubr.bf16.gmra.mxu0 %v999
    %v1129 = vpop.f32.mrf.mxu0
    %v1130 = vadd.f32 %v1021, %v1129
    %v1131 = vpop.f32.mrf.mxu0
    %v1132 = vpop.f32.mrf.mxu0
    %v1133 = vadd.f32 %v1021, %v1132
    %v1134 = vpop.f32.mrf.mxu0
    %1135 = vdwg.mxu0
    %v1136 = vand.u32 2147483647, %v1106
    %vm1137 = vcmp.le.f32.partialorder %v1136, 0.7853982
    %vm1138 = vcmp.lt.s32.totalorder %v1106, 0
    %v1139 = vand.u32 %v1106, 2139095040
    %v1140 = vshrl.u32 %v1139, 23
    %v1141 = vsub.s32 %v1140, 127
    %v1142 = vand.u32 2147483647, %v1106
    %v1143 = vand.u32 %v1142, 8388607
    %v1144 = vor.u32 %v1143, 8388608
    %v1145 = vsub.s32 0, %v1144
    %v1146 = vadd.s32 %v1141, 1
    %vm1147 = vcmp.gt.s32.totalorder %v1146, 0
    %v1148 = vsel %vm1147, %v1146, 0
    %v1149 = vshrl.u32 %v1148, 5
    %v1150 = vand.u32 %v1148, 31
    %v1151 = vsub.s32 32, %v1150
    %v1152 = vshrl.u32 683565275, %v1151
    %v1153 = vshll.u32 683565275, %v1150
    %v1154 = vshrl.u32 2475754826, %v1151
    %v1155 = vor.u32 %v1153, %v1154
    %v1156 = vshll.u32 2475754826, %v1150
    %v1157 = vshrl.u32 2131351028, %v1151
    %v1158 = vor.u32 %v1156, %v1157
    %v1159 = vshll.u32 2131351028, %v1150
    %v1160 = vshrl.u32 2102212464, %v1151
    %v1161 = vor.u32 %v1159, %v1160
    %v1162 = vshll.u32 2102212464, %v1150
    %v1163 = vshrl.u32 920167782, %v1151
    %v1164 = vor.u32 %v1162, %v1163
    %v1165 = vshll.u32 920167782, %v1150
    %v1166 = vshrl.u32 1326507024, %v1151
    %v1167 = vor.u32 %v1165, %v1166
    %vm1168 = vcmp.lt.s32.totalorder %v1149, 1
    %vm1169 = vcmp.lt.s32.totalorder %v1149, 2
    %vm1170 = vcmp.lt.s32.totalorder %v1149, 3
    %vm1171 = vcmp.lt.s32.totalorder %v1149, 4
    %v1172 = vsel %vm1168, %v1152, %v1155
    %v1173 = vsel %vm1171, %v1161, 2102212464
    %v1174 = vsel %vm1170, %v1158, %v1173
    %v1175 = vsel %vm1169, %v1172, %v1174
    %v1176 = vsel %vm1168, %v1155, %v1158
    %v1177 = vsel %vm1171, %v1164, 920167782
    %v1178 = vsel %vm1170, %v1161, %v1177
    %v1179 = vsel %vm1169, %v1176, %v1178
    %v1180 = vsel %vm1168, %v1158, %v1161
    %v1181 = vsel %vm1171, %v1167, 1326507024
    %v1182 = vsel %vm1170, %v1164, %v1181
    %v1183 = vsel %vm1169, %v1180, %v1182
    %v1184 = vshll.u32 %v1144, 8
    %v1185 = vmul.u32.u64.compose %v1184, %v1183
    %v1186 = vextract.low.u32 %v1185
    %v1187 = vextract.high.u32 %v1185
    %v1188 = vmul.u32.u64.compose %v1184, %v1179
    %v1189 = vextract.low.u32 %v1188
    %v1190 = vextract.high.u32 %v1188
    %v1191 = vmul.u32 %v1184, %v1175
    %v1192 = vadd.s32 %v1187, %v1189
    %vm1193 = vc.u32 %v1187, %v1189
    %v1194 = vadd.s32 %v1190, 1
    %v1195 = vsel %vm1193, %v1194, %v1190
    %v1196 = vadd.s32 %v1191, %v1195
    %v1197 = vadd.s32 %v1196, 536870912
    %v1198 = vshrl.u32 %v1197, 30
    %v1199 = vshll.u32 %v1198, 30
    %v1200 = vsub.s32 %v1196, %v1199
    %vm1201 = vcmp.lt.s32.totalorder %v1200, 0
    %v1202 = vsub.s32 0, %v1200
    %v1203 = vsel %vm1201, %v1202, %v1200
    %v1204 = vclz %v1203
    %v1205 = vsub.s32 %v1204, 2
    %vm1206 = vcmp.gt.s32.totalorder 0, %v1205
    %v1207 = vsel %vm1206, 0, %v1205
    %v1208 = vsub.s32 32, %v1207
    %v1209 = vshll.u32 %v1200, %v1207
    %v1210 = vshrl.u32 %v1192, %v1208
    %v1211 = vor.u32 %v1209, %v1210
    %v1212 = vsub.s32 4294967266, %v1207
    %v1213 = vadd.s32 %v1212, 127
    %v1214 = vshll.u32 %v1213, 23
    %v1215 = vor.u32 4788187, %v1214
    %v1216 = vand.u32 2147483647, %v1215
    %v1218 = vcvt.s32.f32 %v1211
    %v1219 = vmul.f32 %v1218, %v1216
    %v1220 = vxor.u32 %v1219, 2147483648
    %v1221 = vsel %vm1138, %v1220, %v1219
    %v1222 = vsub.s32 4, %v1198
    %v1223 = vsel %vm1138, %v1222, %v1198
    %v1224 = vsel %vm1137, %v1106, %v1221
    %v1225 = vsel %vm1137, 0, %v1223
    %v1226 = vcosq.f32.pop %v1224
    %v1227 = vsinq.f32.pop %v1224
    %vm1228 = vweird.f32 %v1106
    %v1229 = vadd.s32 %v1225, 3
    %v1230 = vand.u32 %v1229, 3
    %vm1231 = vcmp.lt.s32.totalorder %v1230, 2
    %vm1232 = vcmp.eq.s32.totalorder %v1230, 0
    %v1233 = vxor.u32 %v1227, 2147483648
    %v1234 = vsel %vm1232, %v1226, %v1233
    %vm1235 = vcmp.eq.s32.totalorder %v1230, 2
    %v1236 = vxor.u32 %v1226, 2147483648
    %v1237 = vsel %vm1235, %v1236, %v1227
    %v1238 = vsel %vm1231, %v1234, %v1237
    %v1239 = vsel %vm1228, nan, %v1238
    %v1240 = vand.u32 2147483647, %v1109
    %vm1241 = vcmp.le.f32.partialorder %v1240, 0.7853982
    %vm1242 = vcmp.lt.s32.totalorder %v1109, 0
    %v1243 = vand.u32 %v1109, 2139095040
    %v1244 = vshrl.u32 %v1243, 23
    %v1245 = vsub.s32 %v1244, 127
    %v1246 = vand.u32 2147483647, %v1109
    %v1247 = vand.u32 %v1246, 8388607
    %v1248 = vor.u32 %v1247, 8388608
    %v1249 = vsub.s32 0, %v1248
    %v1250 = vadd.s32 %v1245, 1
    %vm1251 = vcmp.gt.s32.totalorder %v1250, 0
    %v1252 = vsel %vm1251, %v1250, 0
    %v1253 = vshrl.u32 %v1252, 5
    %v1254 = vand.u32 %v1252, 31
    %v1255 = vsub.s32 32, %v1254
    %v1256 = vshrl.u32 683565275, %v1255
    %v1257 = vshll.u32 683565275, %v1254
    %v1258 = vshrl.u32 2475754826, %v1255
    %v1259 = vor.u32 %v1257, %v1258
    %v1260 = vshll.u32 2475754826, %v1254
    %v1261 = vshrl.u32 2131351028, %v1255
    %v1262 = vor.u32 %v1260, %v1261
    %v1263 = vshll.u32 2131351028, %v1254
    %v1264 = vshrl.u32 2102212464, %v1255
    %v1265 = vor.u32 %v1263, %v1264
    %v1266 = vshll.u32 2102212464, %v1254
    %v1267 = vshrl.u32 920167782, %v1255
    %v1268 = vor.u32 %v1266, %v1267
    %v1269 = vshll.u32 920167782, %v1254
    %v1270 = vshrl.u32 1326507024, %v1255
    %v1271 = vor.u32 %v1269, %v1270
    %vm1272 = vcmp.lt.s32.totalorder %v1253, 1
    %vm1273 = vcmp.lt.s32.totalorder %v1253, 2
    %vm1274 = vcmp.lt.s32.totalorder %v1253, 3
    %vm1275 = vcmp.lt.s32.totalorder %v1253, 4
    %v1276 = vsel %vm1272, %v1256, %v1259
    %v1277 = vsel %vm1275, %v1265, 2102212464
    %v1278 = vsel %vm1274, %v1262, %v1277
    %v1279 = vsel %vm1273, %v1276, %v1278
    %v1280 = vsel %vm1272, %v1259, %v1262
    %v1281 = vsel %vm1275, %v1268, 920167782
    %v1282 = vsel %vm1274, %v1265, %v1281
    %v1283 = vsel %vm1273, %v1280, %v1282
    %v1284 = vsel %vm1272, %v1262, %v1265
    %v1285 = vsel %vm1275, %v1271, 1326507024
    %v1286 = vsel %vm1274, %v1268, %v1285
    %v1287 = vsel %vm1273, %v1284, %v1286
    %v1288 = vshll.u32 %v1248, 8
    %v1289 = vmul.u32.u64.compose %v1288, %v1287
    %v1290 = vextract.low.u32 %v1289
    %v1291 = vextract.high.u32 %v1289
    %v1292 = vmul.u32.u64.compose %v1288, %v1283
    %v1293 = vextract.low.u32 %v1292
    %v1294 = vextract.high.u32 %v1292
    %v1295 = vmul.u32 %v1288, %v1279
    %v1296 = vadd.s32 %v1291, %v1293
    %vm1297 = vc.u32 %v1291, %v1293
    %v1298 = vadd.s32 %v1294, 1
    %v1299 = vsel %vm1297, %v1298, %v1294
    %v1300 = vadd.s32 %v1295, %v1299
    %v1301 = vadd.s32 %v1300, 536870912
    %v1302 = vshrl.u32 %v1301, 30
    %v1303 = vshll.u32 %v1302, 30
    %v1304 = vsub.s32 %v1300, %v1303
    %vm1305 = vcmp.lt.s32.totalorder %v1304, 0
    %v1306 = vsub.s32 0, %v1304
    %v1307 = vsel %vm1305, %v1306, %v1304
    %v1308 = vclz %v1307
    %v1309 = vsub.s32 %v1308, 2
    %vm1310 = vcmp.gt.s32.totalorder 0, %v1309
    %v1311 = vsel %vm1310, 0, %v1309
    %v1312 = vsub.s32 32, %v1311
    %v1313 = vshll.u32 %v1304, %v1311
    %v1314 = vshrl.u32 %v1296, %v1312
    %v1315 = vor.u32 %v1313, %v1314
    %v1316 = vsub.s32 4294967266, %v1311
    %v1317 = vadd.s32 %v1316, 127
    %v1318 = vshll.u32 %v1317, 23
    %v1319 = vor.u32 4788187, %v1318
    %v1320 = vand.u32 2147483647, %v1319
    %v1322 = vcvt.s32.f32 %v1315
    %v1323 = vmul.f32 %v1322, %v1320
    %v1324 = vxor.u32 %v1323, 2147483648
    %v1325 = vsel %vm1242, %v1324, %v1323
    %v1326 = vsub.s32 4, %v1302
    %v1327 = vsel %vm1242, %v1326, %v1302
    %v1328 = vsel %vm1241, %v1109, %v1325
    %v1329 = vsel %vm1241, 0, %v1327
    %v1330 = vcosq.f32.pop %v1328
    %v1331 = vsinq.f32.pop %v1328
    %vm1332 = vweird.f32 %v1109
    %v1333 = vadd.s32 %v1329, 3
    %v1334 = vand.u32 %v1333, 3
    %vm1335 = vcmp.lt.s32.totalorder %v1334, 2
    %vm1336 = vcmp.eq.s32.totalorder %v1334, 0
    %v1337 = vxor.u32 %v1331, 2147483648
    %v1338 = vsel %vm1336, %v1330, %v1337
    %vm1339 = vcmp.eq.s32.totalorder %v1334, 2
    %v1340 = vxor.u32 %v1330, 2147483648
    %v1341 = vsel %vm1339, %v1340, %v1331
    %v1342 = vsel %vm1335, %v1338, %v1341
    %v1343 = vsel %vm1332, nan, %v1342
    %v1344 = vand.u32 2147483647, %v1114
    %vm1345 = vcmp.le.f32.partialorder %v1344, 0.7853982
    %vm1346 = vcmp.lt.s32.totalorder %v1114, 0
    %v1347 = vand.u32 %v1114, 2139095040
    %v1348 = vshrl.u32 %v1347, 23
    %v1349 = vsub.s32 %v1348, 127
    %v1350 = vand.u32 2147483647, %v1114
    %v1351 = vand.u32 %v1350, 8388607
    %v1352 = vor.u32 %v1351, 8388608
    %v1353 = vsub.s32 0, %v1352
    %v1354 = vadd.s32 %v1349, 1
    %vm1355 = vcmp.gt.s32.totalorder %v1354, 0
    %v1356 = vsel %vm1355, %v1354, 0
    %v1357 = vshrl.u32 %v1356, 5
    %v1358 = vand.u32 %v1356, 31
    %v1359 = vsub.s32 32, %v1358
    %v1360 = vshrl.u32 683565275, %v1359
    %v1361 = vshll.u32 683565275, %v1358
    %v1362 = vshrl.u32 2475754826, %v1359
    %v1363 = vor.u32 %v1361, %v1362
    %v1364 = vshll.u32 2475754826, %v1358
    %v1365 = vshrl.u32 2131351028, %v1359
    %v1366 = vor.u32 %v1364, %v1365
    %v1367 = vshll.u32 2131351028, %v1358
    %v1368 = vshrl.u32 2102212464, %v1359
    %v1369 = vor.u32 %v1367, %v1368
    %v1370 = vshll.u32 2102212464, %v1358
    %v1371 = vshrl.u32 920167782, %v1359
    %v1372 = vor.u32 %v1370, %v1371
    %v1373 = vshll.u32 920167782, %v1358
    %v1374 = vshrl.u32 1326507024, %v1359
    %v1375 = vor.u32 %v1373, %v1374
    %vm1376 = vcmp.lt.s32.totalorder %v1357, 1
    %vm1377 = vcmp.lt.s32.totalorder %v1357, 2
    %vm1378 = vcmp.lt.s32.totalorder %v1357, 3
    %vm1379 = vcmp.lt.s32.totalorder %v1357, 4
    %v1380 = vsel %vm1376, %v1360, %v1363
    %v1381 = vsel %vm1379, %v1369, 2102212464
    %v1382 = vsel %vm1378, %v1366, %v1381
    %v1383 = vsel %vm1377, %v1380, %v1382
    %v1384 = vsel %vm1376, %v1363, %v1366
    %v1385 = vsel %vm1379, %v1372, 920167782
    %v1386 = vsel %vm1378, %v1369, %v1385
    %v1387 = vsel %vm1377, %v1384, %v1386
    %v1388 = vsel %vm1376, %v1366, %v1369
    %v1389 = vsel %vm1379, %v1375, 1326507024
    %v1390 = vsel %vm1378, %v1372, %v1389
    %v1391 = vsel %vm1377, %v1388, %v1390
    %v1392 = vshll.u32 %v1352, 8
    %v1393 = vmul.u32.u64.compose %v1392, %v1391
    %v1394 = vextract.low.u32 %v1393
    %v1395 = vextract.high.u32 %v1393
    %v1396 = vmul.u32.u64.compose %v1392, %v1387
    %v1397 = vextract.low.u32 %v1396
    %v1398 = vextract.high.u32 %v1396
    %v1399 = vmul.u32 %v1392, %v1383
    %v1400 = vadd.s32 %v1395, %v1397
    %vm1401 = vc.u32 %v1395, %v1397
    %v1402 = vadd.s32 %v1398, 1
    %v1403 = vsel %vm1401, %v1402, %v1398
    %v1404 = vadd.s32 %v1399, %v1403
    %v1405 = vadd.s32 %v1404, 536870912
    %v1406 = vshrl.u32 %v1405, 30
    %v1407 = vshll.u32 %v1406, 30
    %v1408 = vsub.s32 %v1404, %v1407
    %vm1409 = vcmp.lt.s32.totalorder %v1408, 0
    %v1410 = vsub.s32 0, %v1408
    %v1411 = vsel %vm1409, %v1410, %v1408
    %v1412 = vclz %v1411
    %v1413 = vsub.s32 %v1412, 2
    %vm1414 = vcmp.gt.s32.totalorder 0, %v1413
    %v1415 = vsel %vm1414, 0, %v1413
    %v1416 = vsub.s32 32, %v1415
    %v1417 = vshll.u32 %v1408, %v1415
    %v1418 = vshrl.u32 %v1400, %v1416
    %v1419 = vor.u32 %v1417, %v1418
    %v1420 = vsub.s32 4294967266, %v1415
    %v1421 = vadd.s32 %v1420, 127
    %v1422 = vshll.u32 %v1421, 23
    %v1423 = vor.u32 4788187, %v1422
    %v1424 = vand.u32 2147483647, %v1423
    %v1426 = vcvt.s32.f32 %v1419
    %v1427 = vmul.f32 %v1426, %v1424
    %v1428 = vxor.u32 %v1427, 2147483648
    %v1429 = vsel %vm1346, %v1428, %v1427
    %v1430 = vsub.s32 4, %v1406
    %v1431 = vsel %vm1346, %v1430, %v1406
    %v1432 = vsel %vm1345, %v1114, %v1429
    %v1433 = vsel %vm1345, 0, %v1431
    %v1434 = vcosq.f32.pop %v1432
    %v1435 = vsinq.f32.pop %v1432
    %vm1436 = vweird.f32 %v1114
    %v1437 = vadd.s32 %v1433, 3
    %v1438 = vand.u32 %v1437, 3
    %vm1439 = vcmp.lt.s32.totalorder %v1438, 2
    %vm1440 = vcmp.eq.s32.totalorder %v1438, 0
    %v1441 = vxor.u32 %v1435, 2147483648
    %v1442 = vsel %vm1440, %v1434, %v1441
    %vm1443 = vcmp.eq.s32.totalorder %v1438, 2
    %v1444 = vxor.u32 %v1434, 2147483648
    %v1445 = vsel %vm1443, %v1444, %v1435
    %v1446 = vsel %vm1439, %v1442, %v1445
    %v1447 = vsel %vm1436, nan, %v1446
    %v1448 = vand.u32 2147483647, %v1117
    %vm1449 = vcmp.le.f32.partialorder %v1448, 0.7853982
    %vm1450 = vcmp.lt.s32.totalorder %v1117, 0
    %v1451 = vand.u32 %v1117, 2139095040
    %v1452 = vshrl.u32 %v1451, 23
    %v1453 = vsub.s32 %v1452, 127
    %v1454 = vand.u32 2147483647, %v1117
    %v1455 = vand.u32 %v1454, 8388607
    %v1456 = vor.u32 %v1455, 8388608
    %v1457 = vsub.s32 0, %v1456
    %v1458 = vadd.s32 %v1453, 1
    %vm1459 = vcmp.gt.s32.totalorder %v1458, 0
    %v1460 = vsel %vm1459, %v1458, 0
    %v1461 = vshrl.u32 %v1460, 5
    %v1462 = vand.u32 %v1460, 31
    %v1463 = vsub.s32 32, %v1462
    %v1464 = vshrl.u32 683565275, %v1463
    %v1465 = vshll.u32 683565275, %v1462
    %v1466 = vshrl.u32 2475754826, %v1463
    %v1467 = vor.u32 %v1465, %v1466
    %v1468 = vshll.u32 2475754826, %v1462
    %v1469 = vshrl.u32 2131351028, %v1463
    %v1470 = vor.u32 %v1468, %v1469
    %v1471 = vshll.u32 2131351028, %v1462
    %v1472 = vshrl.u32 2102212464, %v1463
    %v1473 = vor.u32 %v1471, %v1472
    %v1474 = vshll.u32 2102212464, %v1462
    %v1475 = vshrl.u32 920167782, %v1463
    %v1476 = vor.u32 %v1474, %v1475
    %v1477 = vshll.u32 920167782, %v1462
    %v1478 = vshrl.u32 1326507024, %v1463
    %v1479 = vor.u32 %v1477, %v1478
    %vm1480 = vcmp.lt.s32.totalorder %v1461, 1
    %vm1481 = vcmp.lt.s32.totalorder %v1461, 2
    %vm1482 = vcmp.lt.s32.totalorder %v1461, 3
    %vm1483 = vcmp.lt.s32.totalorder %v1461, 4
    %v1484 = vsel %vm1480, %v1464, %v1467
    %v1485 = vsel %vm1483, %v1473, 2102212464
    %v1486 = vsel %vm1482, %v1470, %v1485
    %v1487 = vsel %vm1481, %v1484, %v1486
    %v1488 = vsel %vm1480, %v1467, %v1470
    %v1489 = vsel %vm1483, %v1476, 920167782
    %v1490 = vsel %vm1482, %v1473, %v1489
    %v1491 = vsel %vm1481, %v1488, %v1490
    %v1492 = vsel %vm1480, %v1470, %v1473
    %v1493 = vsel %vm1483, %v1479, 1326507024
    %v1494 = vsel %vm1482, %v1476, %v1493
    %v1495 = vsel %vm1481, %v1492, %v1494
    %v1496 = vshll.u32 %v1456, 8
    %v1497 = vmul.u32.u64.compose %v1496, %v1495
    %v1498 = vextract.low.u32 %v1497
    %v1499 = vextract.high.u32 %v1497
    %v1500 = vmul.u32.u64.compose %v1496, %v1491
    %v1501 = vextract.low.u32 %v1500
    %v1502 = vextract.high.u32 %v1500
    %v1503 = vmul.u32 %v1496, %v1487
    %v1504 = vadd.s32 %v1499, %v1501
    %vm1505 = vc.u32 %v1499, %v1501
    %v1506 = vadd.s32 %v1502, 1
    %v1507 = vsel %vm1505, %v1506, %v1502
    %v1508 = vadd.s32 %v1503, %v1507
    %v1509 = vadd.s32 %v1508, 536870912
    %v1510 = vshrl.u32 %v1509, 30
    %v1511 = vshll.u32 %v1510, 30
    %v1512 = vsub.s32 %v1508, %v1511
    %vm1513 = vcmp.lt.s32.totalorder %v1512, 0
    %v1514 = vsub.s32 0, %v1512
    %v1515 = vsel %vm1513, %v1514, %v1512
    %v1516 = vclz %v1515
    %v1517 = vsub.s32 %v1516, 2
    %vm1518 = vcmp.gt.s32.totalorder 0, %v1517
    %v1519 = vsel %vm1518, 0, %v1517
    %v1520 = vsub.s32 32, %v1519
    %v1521 = vshll.u32 %v1512, %v1519
    %v1522 = vshrl.u32 %v1504, %v1520
    %v1523 = vor.u32 %v1521, %v1522
    %v1524 = vsub.s32 4294967266, %v1519
    %v1525 = vadd.s32 %v1524, 127
    %v1526 = vshll.u32 %v1525, 23
    %v1527 = vor.u32 4788187, %v1526
    %v1528 = vand.u32 2147483647, %v1527
    %v1530 = vcvt.s32.f32 %v1523
    %v1531 = vmul.f32 %v1530, %v1528
    %v1532 = vxor.u32 %v1531, 2147483648
    %v1533 = vsel %vm1450, %v1532, %v1531
    %v1534 = vsub.s32 4, %v1510
    %v1535 = vsel %vm1450, %v1534, %v1510
    %v1536 = vsel %vm1449, %v1117, %v1533
    %v1537 = vsel %vm1449, 0, %v1535
    %v1538 = vcosq.f32.pop %v1536
    %v1539 = vsinq.f32.pop %v1536
    %vm1540 = vweird.f32 %v1117
    %v1541 = vadd.s32 %v1537, 3
    %v1542 = vand.u32 %v1541, 3
    %vm1543 = vcmp.lt.s32.totalorder %v1542, 2
    %vm1544 = vcmp.eq.s32.totalorder %v1542, 0
    %v1545 = vxor.u32 %v1539, 2147483648
    %v1546 = vsel %vm1544, %v1538, %v1545
    %vm1547 = vcmp.eq.s32.totalorder %v1542, 2
    %v1548 = vxor.u32 %v1538, 2147483648
    %v1549 = vsel %vm1547, %v1548, %v1539
    %v1550 = vsel %vm1543, %v1546, %v1549
    %v1551 = vsel %vm1540, nan, %v1550
    %v1552 = vand.u32 2147483647, %v1122
    %vm1553 = vcmp.le.f32.partialorder %v1552, 0.7853982
    %vm1554 = vcmp.lt.s32.totalorder %v1122, 0
    %v1555 = vand.u32 %v1122, 2139095040
    %v1556 = vshrl.u32 %v1555, 23
    %v1557 = vsub.s32 %v1556, 127
    %v1558 = vand.u32 2147483647, %v1122
    %v1559 = vand.u32 %v1558, 8388607
    %v1560 = vor.u32 %v1559, 8388608
    %v1561 = vsub.s32 0, %v1560
    %v1562 = vadd.s32 %v1557, 1
    %vm1563 = vcmp.gt.s32.totalorder %v1562, 0
    %v1564 = vsel %vm1563, %v1562, 0
    %v1565 = vshrl.u32 %v1564, 5
    %v1566 = vand.u32 %v1564, 31
    %v1567 = vsub.s32 32, %v1566
    %v1568 = vshrl.u32 683565275, %v1567
    %v1569 = vshll.u32 683565275, %v1566
    %v1570 = vshrl.u32 2475754826, %v1567
    %v1571 = vor.u32 %v1569, %v1570
    %v1572 = vshll.u32 2475754826, %v1566
    %v1573 = vshrl.u32 2131351028, %v1567
    %v1574 = vor.u32 %v1572, %v1573
    %v1575 = vshll.u32 2131351028, %v1566
    %v1576 = vshrl.u32 2102212464, %v1567
    %v1577 = vor.u32 %v1575, %v1576
    %v1578 = vshll.u32 2102212464, %v1566
    %v1579 = vshrl.u32 920167782, %v1567
    %v1580 = vor.u32 %v1578, %v1579
    %v1581 = vshll.u32 920167782, %v1566
    %v1582 = vshrl.u32 1326507024, %v1567
    %v1583 = vor.u32 %v1581, %v1582
    %vm1584 = vcmp.lt.s32.totalorder %v1565, 1
    %vm1585 = vcmp.lt.s32.totalorder %v1565, 2
    %vm1586 = vcmp.lt.s32.totalorder %v1565, 3
    %vm1587 = vcmp.lt.s32.totalorder %v1565, 4
    %v1588 = vsel %vm1584, %v1568, %v1571
    %v1589 = vsel %vm1587, %v1577, 2102212464
    %v1590 = vsel %vm1586, %v1574, %v1589
    %v1591 = vsel %vm1585, %v1588, %v1590
    %v1592 = vsel %vm1584, %v1571, %v1574
    %v1593 = vsel %vm1587, %v1580, 920167782
    %v1594 = vsel %vm1586, %v1577, %v1593
    %v1595 = vsel %vm1585, %v1592, %v1594
    %v1596 = vsel %vm1584, %v1574, %v1577
    %v1597 = vsel %vm1587, %v1583, 1326507024
    %v1598 = vsel %vm1586, %v1580, %v1597
    %v1599 = vsel %vm1585, %v1596, %v1598
    %v1600 = vshll.u32 %v1560, 8
    %v1601 = vmul.u32.u64.compose %v1600, %v1599
    %v1602 = vextract.low.u32 %v1601
    %v1603 = vextract.high.u32 %v1601
    %v1604 = vmul.u32.u64.compose %v1600, %v1595
    %v1605 = vextract.low.u32 %v1604
    %v1606 = vextract.high.u32 %v1604
    %v1607 = vmul.u32 %v1600, %v1591
    %v1608 = vadd.s32 %v1603, %v1605
    %vm1609 = vc.u32 %v1603, %v1605
    %v1610 = vadd.s32 %v1606, 1
    %v1611 = vsel %vm1609, %v1610, %v1606
    %v1612 = vadd.s32 %v1607, %v1611
    %v1613 = vadd.s32 %v1612, 536870912
    %v1614 = vshrl.u32 %v1613, 30
    %v1615 = vshll.u32 %v1614, 30
    %v1616 = vsub.s32 %v1612, %v1615
    %vm1617 = vcmp.lt.s32.totalorder %v1616, 0
    %v1618 = vsub.s32 0, %v1616
    %v1619 = vsel %vm1617, %v1618, %v1616
    %v1620 = vclz %v1619
    %v1621 = vsub.s32 %v1620, 2
    %vm1622 = vcmp.gt.s32.totalorder 0, %v1621
    %v1623 = vsel %vm1622, 0, %v1621
    %v1624 = vsub.s32 32, %v1623
    %v1625 = vshll.u32 %v1616, %v1623
    %v1626 = vshrl.u32 %v1608, %v1624
    %v1627 = vor.u32 %v1625, %v1626
    %v1628 = vsub.s32 4294967266, %v1623
    %v1629 = vadd.s32 %v1628, 127
    %v1630 = vshll.u32 %v1629, 23
    %v1631 = vor.u32 4788187, %v1630
    %v1632 = vand.u32 2147483647, %v1631
    %v1634 = vcvt.s32.f32 %v1627
    %v1635 = vmul.f32 %v1634, %v1632
    %v1636 = vxor.u32 %v1635, 2147483648
    %v1637 = vsel %vm1554, %v1636, %v1635
    %v1638 = vsub.s32 4, %v1614
    %v1639 = vsel %vm1554, %v1638, %v1614
    %v1640 = vsel %vm1553, %v1122, %v1637
    %v1641 = vsel %vm1553, 0, %v1639
    %v1642 = vcosq.f32.pop %v1640
    %v1643 = vsinq.f32.pop %v1640
    %vm1644 = vweird.f32 %v1122
    %v1645 = vadd.s32 %v1641, 3
    %v1646 = vand.u32 %v1645, 3
    %vm1647 = vcmp.lt.s32.totalorder %v1646, 2
    %vm1648 = vcmp.eq.s32.totalorder %v1646, 0
    %v1649 = vxor.u32 %v1643, 2147483648
    %v1650 = vsel %vm1648, %v1642, %v1649
    %vm1651 = vcmp.eq.s32.totalorder %v1646, 2
    %v1652 = vxor.u32 %v1642, 2147483648
    %v1653 = vsel %vm1651, %v1652, %v1643
    %v1654 = vsel %vm1647, %v1650, %v1653
    %v1655 = vsel %vm1644, nan, %v1654
    %v1656 = vand.u32 2147483647, %v1125
    %vm1657 = vcmp.le.f32.partialorder %v1656, 0.7853982
    %vm1658 = vcmp.lt.s32.totalorder %v1125, 0
    %v1659 = vand.u32 %v1125, 2139095040
    %v1660 = vshrl.u32 %v1659, 23
    %v1661 = vsub.s32 %v1660, 127
    %v1662 = vand.u32 2147483647, %v1125
    %v1663 = vand.u32 %v1662, 8388607
    %v1664 = vor.u32 %v1663, 8388608
    %v1665 = vsub.s32 0, %v1664
    %v1666 = vadd.s32 %v1661, 1
    %vm1667 = vcmp.gt.s32.totalorder %v1666, 0
    %v1668 = vsel %vm1667, %v1666, 0
    %v1669 = vshrl.u32 %v1668, 5
    %v1670 = vand.u32 %v1668, 31
    %v1671 = vsub.s32 32, %v1670
    %v1672 = vshrl.u32 683565275, %v1671
    %v1673 = vshll.u32 683565275, %v1670
    %v1674 = vshrl.u32 2475754826, %v1671
    %v1675 = vor.u32 %v1673, %v1674
    %v1676 = vshll.u32 2475754826, %v1670
    %v1677 = vshrl.u32 2131351028, %v1671
    %v1678 = vor.u32 %v1676, %v1677
    %v1679 = vshll.u32 2131351028, %v1670
    %v1680 = vshrl.u32 2102212464, %v1671
    %v1681 = vor.u32 %v1679, %v1680
    %v1682 = vshll.u32 2102212464, %v1670
    %v1683 = vshrl.u32 920167782, %v1671
    %v1684 = vor.u32 %v1682, %v1683
    %v1685 = vshll.u32 920167782, %v1670
    %v1686 = vshrl.u32 1326507024, %v1671
    %v1687 = vor.u32 %v1685, %v1686
    %vm1688 = vcmp.lt.s32.totalorder %v1669, 1
    %vm1689 = vcmp.lt.s32.totalorder %v1669, 2
    %vm1690 = vcmp.lt.s32.totalorder %v1669, 3
    %vm1691 = vcmp.lt.s32.totalorder %v1669, 4
    %v1692 = vsel %vm1688, %v1672, %v1675
    %v1693 = vsel %vm1691, %v1681, 2102212464
    %v1694 = vsel %vm1690, %v1678, %v1693
    %v1695 = vsel %vm1689, %v1692, %v1694
    %v1696 = vsel %vm1688, %v1675, %v1678
    %v1697 = vsel %vm1691, %v1684, 920167782
    %v1698 = vsel %vm1690, %v1681, %v1697
    %v1699 = vsel %vm1689, %v1696, %v1698
    %v1700 = vsel %vm1688, %v1678, %v1681
    %v1701 = vsel %vm1691, %v1687, 1326507024
    %v1702 = vsel %vm1690, %v1684, %v1701
    %v1703 = vsel %vm1689, %v1700, %v1702
    %v1704 = vshll.u32 %v1664, 8
    %v1705 = vmul.u32.u64.compose %v1704, %v1703
    %v1706 = vextract.low.u32 %v1705
    %v1707 = vextract.high.u32 %v1705
    %v1708 = vmul.u32.u64.compose %v1704, %v1699
    %v1709 = vextract.low.u32 %v1708
    %v1710 = vextract.high.u32 %v1708
    %v1711 = vmul.u32 %v1704, %v1695
    %v1712 = vadd.s32 %v1707, %v1709
    %vm1713 = vc.u32 %v1707, %v1709
    %v1714 = vadd.s32 %v1710, 1
    %v1715 = vsel %vm1713, %v1714, %v1710
    %v1716 = vadd.s32 %v1711, %v1715
    %v1717 = vadd.s32 %v1716, 536870912
    %v1718 = vshrl.u32 %v1717, 30
    %v1719 = vshll.u32 %v1718, 30
    %v1720 = vsub.s32 %v1716, %v1719
    %vm1721 = vcmp.lt.s32.totalorder %v1720, 0
    %v1722 = vsub.s32 0, %v1720
    %v1723 = vsel %vm1721, %v1722, %v1720
    %v1724 = vclz %v1723
    %v1725 = vsub.s32 %v1724, 2
    %vm1726 = vcmp.gt.s32.totalorder 0, %v1725
    %v1727 = vsel %vm1726, 0, %v1725
    %v1728 = vsub.s32 32, %v1727
    %v1729 = vshll.u32 %v1720, %v1727
    %v1730 = vshrl.u32 %v1712, %v1728
    %v1731 = vor.u32 %v1729, %v1730
    %v1732 = vsub.s32 4294967266, %v1727
    %v1733 = vadd.s32 %v1732, 127
    %v1734 = vshll.u32 %v1733, 23
    %v1735 = vor.u32 4788187, %v1734
    %v1736 = vand.u32 2147483647, %v1735
    %v1738 = vcvt.s32.f32 %v1731
    %v1739 = vmul.f32 %v1738, %v1736
    %v1740 = vxor.u32 %v1739, 2147483648
    %v1741 = vsel %vm1658, %v1740, %v1739
    %v1742 = vsub.s32 4, %v1718
    %v1743 = vsel %vm1658, %v1742, %v1718
    %v1744 = vsel %vm1657, %v1125, %v1741
    %v1745 = vsel %vm1657, 0, %v1743
    %v1746 = vcosq.f32.pop %v1744
    %v1747 = vsinq.f32.pop %v1744
    %vm1748 = vweird.f32 %v1125
    %v1749 = vadd.s32 %v1745, 3
    %v1750 = vand.u32 %v1749, 3
    %vm1751 = vcmp.lt.s32.totalorder %v1750, 2
    %vm1752 = vcmp.eq.s32.totalorder %v1750, 0
    %v1753 = vxor.u32 %v1747, 2147483648
    %v1754 = vsel %vm1752, %v1746, %v1753
    %vm1755 = vcmp.eq.s32.totalorder %v1750, 2
    %v1756 = vxor.u32 %v1746, 2147483648
    %v1757 = vsel %vm1755, %v1756, %v1747
    %v1758 = vsel %vm1751, %v1754, %v1757
    %v1759 = vsel %vm1748, nan, %v1758
    %v1760 = vand.u32 2147483647, %v1130
    %vm1761 = vcmp.le.f32.partialorder %v1760, 0.7853982
    %vm1762 = vcmp.lt.s32.totalorder %v1130, 0
    %v1763 = vand.u32 %v1130, 2139095040
    %v1764 = vshrl.u32 %v1763, 23
    %v1765 = vsub.s32 %v1764, 127
    %v1766 = vand.u32 2147483647, %v1130
    %v1767 = vand.u32 %v1766, 8388607
    %v1768 = vor.u32 %v1767, 8388608
    %v1769 = vsub.s32 0, %v1768
    %v1770 = vadd.s32 %v1765, 1
    %vm1771 = vcmp.gt.s32.totalorder %v1770, 0
    %v1772 = vsel %vm1771, %v1770, 0
    %v1773 = vshrl.u32 %v1772, 5
    %v1774 = vand.u32 %v1772, 31
    %v1775 = vsub.s32 32, %v1774
    %v1776 = vshrl.u32 683565275, %v1775
    %v1777 = vshll.u32 683565275, %v1774
    %v1778 = vshrl.u32 2475754826, %v1775
    %v1779 = vor.u32 %v1777, %v1778
    %v1780 = vshll.u32 2475754826, %v1774
    %v1781 = vshrl.u32 2131351028, %v1775
    %v1782 = vor.u32 %v1780, %v1781
    %v1783 = vshll.u32 2131351028, %v1774
    %v1784 = vshrl.u32 2102212464, %v1775
    %v1785 = vor.u32 %v1783, %v1784
    %v1786 = vshll.u32 2102212464, %v1774
    %v1787 = vshrl.u32 920167782, %v1775
    %v1788 = vor.u32 %v1786, %v1787
    %v1789 = vshll.u32 920167782, %v1774
    %v1790 = vshrl.u32 1326507024, %v1775
    %v1791 = vor.u32 %v1789, %v1790
    %vm1792 = vcmp.lt.s32.totalorder %v1773, 1
    %vm1793 = vcmp.lt.s32.totalorder %v1773, 2
    %vm1794 = vcmp.lt.s32.totalorder %v1773, 3
    %vm1795 = vcmp.lt.s32.totalorder %v1773, 4
    %v1796 = vsel %vm1792, %v1776, %v1779
    %v1797 = vsel %vm1795, %v1785, 2102212464
    %v1798 = vsel %vm1794, %v1782, %v1797
    %v1799 = vsel %vm1793, %v1796, %v1798
    %v1800 = vsel %vm1792, %v1779, %v1782
    %v1801 = vsel %vm1795, %v1788, 920167782
    %v1802 = vsel %vm1794, %v1785, %v1801
    %v1803 = vsel %vm1793, %v1800, %v1802
    %v1804 = vsel %vm1792, %v1782, %v1785
    %v1805 = vsel %vm1795, %v1791, 1326507024
    %v1806 = vsel %vm1794, %v1788, %v1805
    %v1807 = vsel %vm1793, %v1804, %v1806
    %v1808 = vshll.u32 %v1768, 8
    %v1809 = vmul.u32.u64.compose %v1808, %v1807
    %v1810 = vextract.low.u32 %v1809
    %v1811 = vextract.high.u32 %v1809
    %v1812 = vmul.u32.u64.compose %v1808, %v1803
    %v1813 = vextract.low.u32 %v1812
    %v1814 = vextract.high.u32 %v1812
    %v1815 = vmul.u32 %v1808, %v1799
    %v1816 = vadd.s32 %v1811, %v1813
    %vm1817 = vc.u32 %v1811, %v1813
    %v1818 = vadd.s32 %v1814, 1
    %v1819 = vsel %vm1817, %v1818, %v1814
    %v1820 = vadd.s32 %v1815, %v1819
    %v1821 = vadd.s32 %v1820, 536870912
    %v1822 = vshrl.u32 %v1821, 30
    %v1823 = vshll.u32 %v1822, 30
    %v1824 = vsub.s32 %v1820, %v1823
    %vm1825 = vcmp.lt.s32.totalorder %v1824, 0
    %v1826 = vsub.s32 0, %v1824
    %v1827 = vsel %vm1825, %v1826, %v1824
    %v1828 = vclz %v1827
    %v1829 = vsub.s32 %v1828, 2
    %vm1830 = vcmp.gt.s32.totalorder 0, %v1829
    %v1831 = vsel %vm1830, 0, %v1829
    %v1832 = vsub.s32 32, %v1831
    %v1833 = vshll.u32 %v1824, %v1831
    %v1834 = vshrl.u32 %v1816, %v1832
    %v1835 = vor.u32 %v1833, %v1834
    %v1836 = vsub.s32 4294967266, %v1831
    %v1837 = vadd.s32 %v1836, 127
    %v1838 = vshll.u32 %v1837, 23
    %v1839 = vor.u32 4788187, %v1838
    %v1840 = vand.u32 2147483647, %v1839
    %v1842 = vcvt.s32.f32 %v1835
    %v1843 = vmul.f32 %v1842, %v1840
    %v1844 = vxor.u32 %v1843, 2147483648
    %v1845 = vsel %vm1762, %v1844, %v1843
    %v1846 = vsub.s32 4, %v1822
    %v1847 = vsel %vm1762, %v1846, %v1822
    %v1848 = vsel %vm1761, %v1130, %v1845
    %v1849 = vsel %vm1761, 0, %v1847
    %v1850 = vcosq.f32.pop %v1848
    %v1851 = vsinq.f32.pop %v1848
    %vm1852 = vweird.f32 %v1130
    %v1853 = vadd.s32 %v1849, 3
    %v1854 = vand.u32 %v1853, 3
    %vm1855 = vcmp.lt.s32.totalorder %v1854, 2
    %vm1856 = vcmp.eq.s32.totalorder %v1854, 0
    %v1857 = vxor.u32 %v1851, 2147483648
    %v1858 = vsel %vm1856, %v1850, %v1857
    %vm1859 = vcmp.eq.s32.totalorder %v1854, 2
    %v1860 = vxor.u32 %v1850, 2147483648
    %v1861 = vsel %vm1859, %v1860, %v1851
    %v1862 = vsel %vm1855, %v1858, %v1861
    %v1863 = vsel %vm1852, nan, %v1862
    %v1864 = vand.u32 2147483647, %v1133
    %vm1865 = vcmp.le.f32.partialorder %v1864, 0.7853982
    %vm1866 = vcmp.lt.s32.totalorder %v1133, 0
    %v1867 = vand.u32 %v1133, 2139095040
    %v1868 = vshrl.u32 %v1867, 23
    %v1869 = vsub.s32 %v1868, 127
    %v1870 = vand.u32 2147483647, %v1133
    %v1871 = vand.u32 %v1870, 8388607
    %v1872 = vor.u32 %v1871, 8388608
    %v1873 = vsub.s32 0, %v1872
    %v1874 = vadd.s32 %v1869, 1
    %vm1875 = vcmp.gt.s32.totalorder %v1874, 0
    %v1876 = vsel %vm1875, %v1874, 0
    %v1877 = vshrl.u32 %v1876, 5
    %v1878 = vand.u32 %v1876, 31
    %v1879 = vsub.s32 32, %v1878
    %v1880 = vshrl.u32 683565275, %v1879
    %v1881 = vshll.u32 683565275, %v1878
    %v1882 = vshrl.u32 2475754826, %v1879
    %v1883 = vor.u32 %v1881, %v1882
    %v1884 = vshll.u32 2475754826, %v1878
    %v1885 = vshrl.u32 2131351028, %v1879
    %v1886 = vor.u32 %v1884, %v1885
    %v1887 = vshll.u32 2131351028, %v1878
    %v1888 = vshrl.u32 2102212464, %v1879
    %v1889 = vor.u32 %v1887, %v1888
    %v1890 = vshll.u32 2102212464, %v1878
    %v1891 = vshrl.u32 920167782, %v1879
    %v1892 = vor.u32 %v1890, %v1891
    %v1893 = vshll.u32 920167782, %v1878
    %v1894 = vshrl.u32 1326507024, %v1879
    %v1895 = vor.u32 %v1893, %v1894
    %vm1896 = vcmp.lt.s32.totalorder %v1877, 1
    %vm1897 = vcmp.lt.s32.totalorder %v1877, 2
    %vm1898 = vcmp.lt.s32.totalorder %v1877, 3
    %vm1899 = vcmp.lt.s32.totalorder %v1877, 4
    %v1900 = vsel %vm1896, %v1880, %v1883
    %v1901 = vsel %vm1899, %v1889, 2102212464
    %v1902 = vsel %vm1898, %v1886, %v1901
    %v1903 = vsel %vm1897, %v1900, %v1902
    %v1904 = vsel %vm1896, %v1883, %v1886
    %v1905 = vsel %vm1899, %v1892, 920167782
    %v1906 = vsel %vm1898, %v1889, %v1905
    %v1907 = vsel %vm1897, %v1904, %v1906
    %v1908 = vsel %vm1896, %v1886, %v1889
    %v1909 = vsel %vm1899, %v1895, 1326507024
    %v1910 = vsel %vm1898, %v1892, %v1909
    %v1911 = vsel %vm1897, %v1908, %v1910
    %v1912 = vshll.u32 %v1872, 8
    %v1913 = vmul.u32.u64.compose %v1912, %v1911
    %v1914 = vextract.low.u32 %v1913
    %v1915 = vextract.high.u32 %v1913
    %v1916 = vmul.u32.u64.compose %v1912, %v1907
    %v1917 = vextract.low.u32 %v1916
    %v1918 = vextract.high.u32 %v1916
    %v1919 = vmul.u32 %v1912, %v1903
    %v1920 = vadd.s32 %v1915, %v1917
    %vm1921 = vc.u32 %v1915, %v1917
    %v1922 = vadd.s32 %v1918, 1
    %v1923 = vsel %vm1921, %v1922, %v1918
    %v1924 = vadd.s32 %v1919, %v1923
    %v1925 = vadd.s32 %v1924, 536870912
    %v1926 = vshrl.u32 %v1925, 30
    %v1927 = vshll.u32 %v1926, 30
    %v1928 = vsub.s32 %v1924, %v1927
    %vm1929 = vcmp.lt.s32.totalorder %v1928, 0
    %v1930 = vsub.s32 0, %v1928
    %v1931 = vsel %vm1929, %v1930, %v1928
    %v1932 = vclz %v1931
    %v1933 = vsub.s32 %v1932, 2
    %vm1934 = vcmp.gt.s32.totalorder 0, %v1933
    %v1935 = vsel %vm1934, 0, %v1933
    %v1936 = vsub.s32 32, %v1935
    %v1937 = vshll.u32 %v1928, %v1935
    %v1938 = vshrl.u32 %v1920, %v1936
    %v1939 = vor.u32 %v1937, %v1938
    %v1940 = vsub.s32 4294967266, %v1935
    %v1941 = vadd.s32 %v1940, 127
    %v1942 = vshll.u32 %v1941, 23
    %v1943 = vor.u32 4788187, %v1942
    %v1944 = vand.u32 2147483647, %v1943
    %v1946 = vcvt.s32.f32 %v1939
    %v1947 = vmul.f32 %v1946, %v1944
    %v1948 = vxor.u32 %v1947, 2147483648
    %v1949 = vsel %vm1866, %v1948, %v1947
    %v1950 = vsub.s32 4, %v1926
    %v1951 = vsel %vm1866, %v1950, %v1926
    %v1952 = vsel %vm1865, %v1133, %v1949
    %v1953 = vsel %vm1865, 0, %v1951
    %v1954 = vcosq.f32.pop %v1952
    %v1955 = vsinq.f32.pop %v1952
    %vm1956 = vweird.f32 %v1133
    %v1957 = vadd.s32 %v1953, 3
    %v1958 = vand.u32 %v1957, 3
    %vm1959 = vcmp.lt.s32.totalorder %v1958, 2
    %vm1960 = vcmp.eq.s32.totalorder %v1958, 0
    %v1961 = vxor.u32 %v1955, 2147483648
    %v1962 = vsel %vm1960, %v1954, %v1961
    %vm1963 = vcmp.eq.s32.totalorder %v1958, 2
    %v1964 = vxor.u32 %v1954, 2147483648
    %v1965 = vsel %vm1963, %v1964, %v1955
    %v1966 = vsel %vm1959, %v1962, %v1965
    %v1967 = vsel %vm1956, nan, %v1966
    %v1968 = vpack.c.bf16 %v1343, %v1239
    %v1969 = vpack.c.bf16 %v1551, %v1447
    %v1970 = vpack.c.bf16 %v1759, %v1655
    %v1971 = vpack.c.bf16 %v1967, %v1863
    %s1972 = scalar_lea.vmem [#allocation2], 64
    %v1973 = vld [vmem:[%s1972] sm:$0xf]
    %v1974 = vld [vmem:[%s1972 + $0x4] sm:$0xf]
    %v1975 = vld [vmem:[%s1972 + $0x8] sm:$0xf]
    %v1976 = vld [vmem:[%s1972 + $0xc] sm:$0xf]
    %v1977 = vld [vmem:[%s1972 + $0x10] sm:$0xf]
    %v1978 = vld [vmem:[%s1972 + $0x14] sm:$0xf]
    %v1979 = vld [vmem:[%s1972 + $0x18] sm:$0xf]
    %v1980 = vld [vmem:[%s1972 + $0x1c] sm:$0xf]
    %v1981 = vld [vmem:[%s1972 + $0x20] sm:$0xf]
    %v1982 = vld [vmem:[%s1972 + $0x24] sm:$0xf]
    %v1983 = vld [vmem:[%s1972 + $0x28] sm:$0xf]
    %v1984 = vld [vmem:[%s1972 + $0x2c] sm:$0xf]
    %v1985 = vld [vmem:[%s1972 + $0x30] sm:$0xf]
    %v1986 = vld [vmem:[%s1972 + $0x34] sm:$0xf]
    %v1987 = vld [vmem:[%s1972 + $0x38] sm:$0xf]
    %v1988 = vld [vmem:[%s1972 + $0x3c] sm:$0xf]
    %s1989 = scalar_lea.vmem %s4, 1
    %v1990 = vld [vmem:[%s1989] sm:$0x1]
    %v1992 = vlaneseq
    %v1993 = vshrl.u32 %v1992, 7
    %v1994 = vsub.s32 0, %v1993
    %v1995 = vrot.slane %v1990, %v1994
    %v2013 = vunpack.c.l.b16 %v1973
    %v2014 = vunpack.c.l.b16 %v1974
    %v2015 = vunpack.c.l.b16 %v1975
    %v2016 = vunpack.c.l.b16 %v1976
    %v2017 = vunpack.c.l.b16 %v1977
    %v2018 = vunpack.c.l.b16 %v1978
    %v2019 = vunpack.c.l.b16 %v1979
    %v2020 = vunpack.c.l.b16 %v1980
    %v2021 = vunpack.c.l.b16 %v1981
    %v2022 = vunpack.c.l.b16 %v1982
    %v2023 = vunpack.c.l.b16 %v1983
    %v2024 = vunpack.c.l.b16 %v1984
    %v2025 = vunpack.c.l.b16 %v1985
    %v2026 = vunpack.c.l.b16 %v1986
    %v2027 = vunpack.c.l.b16 %v1987
    %v2028 = vunpack.c.l.b16 %v1988
    %v2029 = vpack.c.b16 %v2014, %v2013
    %v2030 = vpack.c.b16 %v2016, %v2015
    %v2031 = vpack.c.b16 %v2018, %v2017
    %v2032 = vpack.c.b16 %v2020, %v2019
    %v2033 = vpack.c.b16 %v2022, %v2021
    %v2034 = vpack.c.b16 %v2024, %v2023
    %v2035 = vpack.c.b16 %v2026, %v2025
    %v2036 = vpack.c.b16 %v2028, %v2027
    %2045 = vmatprep.subr.bf16.mxu0 0
    %2046 = vmatpush1.bf16.msra.mxu0 %v2036
    %2047 = vmatprep.subr.bf16.mxu0 0
    %2048 = vmatpush1.bf16.msra.mxu0 %v2035
    %2049 = vmatprep.subr.bf16.mxu0 0
    %2050 = vmatpush1.bf16.msra.mxu0 %v2034
    %2051 = vmatprep.subr.bf16.mxu0 0
    %2052 = vmatpush1.bf16.msra.mxu0 %v2033
    %2053 = vmatprep.subr.bf16.mxu0 0
    %2054 = vmatpush1.bf16.msra.mxu0 %v2032
    %2055 = vmatprep.subr.bf16.mxu0 0
    %2056 = vmatpush1.bf16.msra.mxu0 %v2031
    %2057 = vmatprep.subr.bf16.mxu0 0
    %2058 = vmatpush1.bf16.msra.mxu0 %v2030
    %2059 = vmatprep.subr.bf16.mxu0 0
    %2060 = vmatpush1.bf16.msra.mxu0 %v2029
    %2061 = vmatprep.subr.bf16.mxu0 0
    %2062 = vmatpush2.bf16.msra.mxu0 0
    %2063 = vmatprep.subr.bf16.mxu0 0
    %2064 = vmatpush2.bf16.msra.mxu0 0
    %2065 = vmatprep.subr.bf16.mxu0 0
    %2066 = vmatpush2.bf16.msra.mxu0 0
    %2067 = vmatprep.subr.bf16.mxu0 0
    %2068 = vmatpush2.bf16.msra.mxu0 0
    %2069 = vmatprep.subr.bf16.mxu0 0
    %2070 = vmatpush2.bf16.msra.mxu0 0
    %2071 = vmatprep.subr.bf16.mxu0 0
    %2072 = vmatpush2.bf16.msra.mxu0 0
    %2073 = vmatprep.subr.bf16.mxu0 0
    %2074 = vmatpush2.bf16.msra.mxu0 0
    %2075 = vmatprep.subr.bf16.mxu0 0
    %2076 = vmatpush2.bf16.msra.mxu0 0
    %2077 = vmatprep.mubr.bf16.mxu0 0
    %2078 = vmatmul.mubr.bf16.gmra.mxu0 %v1968
    %v2079 = vpop.f32.mrf.mxu0
    %v2080 = vadd.f32 %v1995, %v2079
    %v2081 = vpop.f32.mrf.mxu0
    %v2082 = vpop.f32.mrf.mxu0
    %v2083 = vadd.f32 %v1995, %v2082
    %v2084 = vpop.f32.mrf.mxu0
    %2085 = vmatprep.mubr.bf16.mxu0 0
    %2086 = vmatmul.mubr.bf16.gmra.mxu0 %v1969
    %v2087 = vpop.f32.mrf.mxu0
    %v2088 = vadd.f32 %v1995, %v2087
    %v2089 = vpop.f32.mrf.mxu0
    %v2090 = vpop.f32.mrf.mxu0
    %v2091 = vadd.f32 %v1995, %v2090
    %v2092 = vpop.f32.mrf.mxu0
    %2093 = vmatprep.mubr.bf16.mxu0 0
    %2094 = vmatmul.mubr.bf16.gmra.mxu0 %v1970
    %v2095 = vpop.f32.mrf.mxu0
    %v2096 = vadd.f32 %v1995, %v2095
    %v2097 = vpop.f32.mrf.mxu0
    %v2098 = vpop.f32.mrf.mxu0
    %v2099 = vadd.f32 %v1995, %v2098
    %v2100 = vpop.f32.mrf.mxu0
    %2101 = vmatprep.mubr.bf16.mxu0 0
    %2102 = vmatmul.mubr.bf16.gmra.mxu0 %v1971
    %v2103 = vpop.f32.mrf.mxu0
    %v2104 = vadd.f32 %v1995, %v2103
    %v2105 = vpop.f32.mrf.mxu0
    %v2106 = vpop.f32.mrf.mxu0
    %v2107 = vadd.f32 %v1995, %v2106
    %v2108 = vpop.f32.mrf.mxu0
    %2109 = vdwg.mxu0
    %v2110 = vlaneseq
    %v2111 = vand.u32 %v2110, 127
    %vm2112 = vcmp.ge.s32.totalorder %v2111, 1
    %vm2113 = vcmp.lt.s32.totalorder %v2111, 2
    %vm2114 = vmand %vm2112, %vm2113
    %v2115 = vmul.f32 %v2080, 1.442695
    %v2116 = vpow.pop %v2115
    %v2117 = vmul.f32 %v2083, 1.442695
    %v2118 = vpow.pop %v2117
    %v2119 = vmul.f32 %v2088, 1.442695
    %v2120 = vpow.pop %v2119
    %v2121 = vmul.f32 %v2091, 1.442695
    %v2122 = vpow.pop %v2121
    %v2123 = vmul.f32 %v2096, 1.442695
    %v2124 = vpow.pop %v2123
    %v2125 = vmul.f32 %v2099, 1.442695
    %v2126 = vpow.pop %v2125
    %v2127 = vmul.f32 %v2104, 1.442695
    %v2128 = vpow.pop %v2127
    %v2129 = vmul.f32 %v2107, 1.442695
    %v2130 = vpow.pop %v2129
    %v2131 = vsel %vm2114, 1, 0
    %vm2132 = vcmp.eq.s32.totalorder %v2131, 1
    %v2133 = vsel %vm2132, %v2116, %v2080
    %v2134 = vsel %vm2132, %v2118, %v2083
    %v2135 = vsel %vm2132, %v2120, %v2088
    %v2136 = vsel %vm2132, %v2122, %v2091
    %v2137 = vsel %vm2132, %v2124, %v2096
    %v2138 = vsel %vm2132, %v2126, %v2099
    %v2139 = vsel %vm2132, %v2128, %v2104
    %v2140 = vsel %vm2132, %v2130, %v2107
    %vm2141 = vcmask 15360
    %2142 = vst.msk [vmem:[%s5] sm:$0xff] %vm2141, %v2133
    %2143 = vst.msk [vmem:[%s5 + $0x8] sm:$0xff] %vm2141, %v2134
    %2144 = vst.msk [vmem:[%s5 + $0x10] sm:$0xff] %vm2141, %v2135
    %2145 = vst.msk [vmem:[%s5 + $0x18] sm:$0xff] %vm2141, %v2136
    %2146 = vst.msk [vmem:[%s5 + $0x20] sm:$0xff] %vm2141, %v2137
    %2147 = vst.msk [vmem:[%s5 + $0x28] sm:$0xff] %vm2141, %v2138
    %2148 = vst.msk [vmem:[%s5 + $0x30] sm:$0xff] %vm2141, %v2139
    %2149 = vst.msk [vmem:[%s5 + $0x38] sm:$0xff] %vm2141, %v2140
    // Predicated region
    $region26: #{tpu_custom_call.1} parent=1 // pred_check
      _
    $region27: #{tpu_custom_call.1} parent=1 // pred_check_branch
      %2151 = sbr.rel (0) target = $region29
    $region28: #{tpu_custom_call.1} parent=1 // pred_region
      _
    $region29: #{tpu_custom_call.1} parent=1 // pred_fallthru
      _
    // Predicated region
    $region30: #{tpu_custom_call.1} parent=1 // pred_check
      _
    $region31: #{tpu_custom_call.1} parent=1 // pred_check_branch
      %2153 = sbr.rel (0) target = $region33
    $region32: #{tpu_custom_call.1} parent=1 // pred_region
      _
    $region33: #{tpu_custom_call.1} parent=1 // pred_fallthru
      _
    %2154 = vsyncpa [#allocation3], 1

</llo_original>
